<compile_context>
chip_gen: v7x
topology: tpu7x:2x2x1
jax: 0.10.0
libtpu: 0.0.40
codegen_flags: <defaults>
</compile_context>

<pallas_src>
import math

import jax
import jax.numpy as jnp
from jax.experimental import pallas as pl
from jax.experimental.pallas import tpu as pltpu

# ---- module hyper-parameters (match the PyTorch module) ---------------------
H = 32            # num_units
N = 16            # num_nodes
K = 2             # max_diffusion_step
M = K + 1         # num_matrices

# matrix index -> power of the random-walk matrix actually applied (the torch
# code re-appends the previous diffusion term at step k, so m>=2 maps to m-1).
PMAP = [0, 1] + [m - 1 for m in range(2, K + 1)]
Q = max(PMAP)                     # highest power of A ever used (=1 for K=2)

BT = 8                            # batch elements per grid step
R = BT * N                        # 128 matmul rows per grid step
F1_DIM = (1 + 2 * Q) * 2 * H      # stacked [x|h] diffusion features  (192)
F2_DIM = (1 + 2 * Q) * H          # stacked r*h diffusion features    (96)


# -----------------------------------------------------------------------------
# Pallas kernel: full DCGRU cell update for BT batch elements per grid step.
# All refs are 2-D; adjacency blocks are (R, R) block-diagonal per step.
# -----------------------------------------------------------------------------
def dcgru_cell_kernel(x_ref, h_ref, adj_ref, adjt_ref,
                      w1_ref, w2_ref, b_ref, out_ref):
    x = x_ref[...]                               # (R, H)
    h = h_ref[...]                               # (R, H)

    eye = jnp.eye(R, dtype=jnp.float32)          # identity only touches diag -> per-block I
    ap0 = adj_ref[...] + eye                     # block-diag(A_b) + I
    ap1 = adjt_ref[...] + eye                    # block-diag(A_b^T) + I

    # _calculate_random_walk0: row i of (A+I) scaled by 1/colsum_i(A+I).
    # colsum_i(ap0) == rowsum_i(ap1): lane reduction, no transpose relayout.
    d0 = jnp.sum(ap1, axis=1, keepdims=True)     # (R, 1) column sums of ap0
    d1 = jnp.sum(ap0, axis=1, keepdims=True)     # (R, 1) column sums of ap1
    inv0 = 1.0 / d0
    inv0 = jnp.where(jnp.isinf(inv0), jnp.zeros_like(inv0), inv0)
    inv1 = 1.0 / d1
    inv1 = jnp.where(jnp.isinf(inv1), jnp.zeros_like(inv1), inv1)
    a0 = inv0 * ap0
    a1 = inv1 * ap1

    # Stack both directions along sublanes: one MXU matmul covers both walks.
    a01 = jnp.concatenate([a0, a1], axis=0)      # (2R, R)

    def diffuse(v):
        """v: (R, F) -> (R, (1+2Q)*F); feature order [v, A0 v, A1 v, A0^2 v, ...]."""
        feats = [v]
        c0 = c1 = v
        for q in range(Q):                       # only powers that are really used
            if q == 0:
                both = jnp.dot(a01, v, preferred_element_type=jnp.float32)  # (2R, F)
                c0, c1 = both[:R], both[R:]
            else:
                c0 = jnp.dot(a0, c0, preferred_element_type=jnp.float32)
                c1 = jnp.dot(a1, c1, preferred_element_type=jnp.float32)
            feats += [c0, c1]
        return jnp.concatenate(feats, axis=-1)

    # ---- stage 1: shared diffusion of [x | hx]; one fused matmul gives the
    #      gate pre-activation (2H cols) AND the candidate x-contribution (H).
    xh = jnp.concatenate([x, h], axis=-1)                           # (R, 2H)
    f1 = diffuse(xh)                                                # (R, F1_DIM)
    g1 = jnp.dot(f1, w1_ref[...],
                 preferred_element_type=jnp.float32) + b_ref[...]   # (R, 3H)

    ru = jax.nn.sigmoid(g1[:, :2 * H])                              # (R, 2H)
    r = ru[:, :H]
    u = ru[:, H:]

    # ---- stage 2: diffusion of r*hx and the candidate h-side matmul.
    f2 = diffuse(r * h)                                             # (R, F2_DIM)
    c = jnp.tanh(g1[:, 2 * H:]
                 + jnp.dot(f2, w2_ref[...], preferred_element_type=jnp.float32))

    out_ref[...] = u * h + (1.0 - u) * c                            # (R, H)


# -----------------------------------------------------------------------------
# Wrapper-side weight fusion
# -----------------------------------------------------------------------------
def _effective_power_weights(w):
    """(M, 2H, out) per-matrix weights -> list over power q of (2H, out)."""
    return [sum(w[m] for m in range(M) if PMAP[m] == q) for q in range(Q + 1)]


def build_fused_weights(params):
    w_ru0, w_ru1, b_ru, w_c0, w_c1, b_c = params
    e_ru0 = _effective_power_weights(w_ru0)
    e_ru1 = _effective_power_weights(w_ru1)
    e_c0 = _effective_power_weights(w_c0)
    e_c1 = _effective_power_weights(w_c1)

    zeros_h = jnp.zeros((H, H), jnp.float32)

    def cand_x(wc):        # keep only the x-half of a (2H, H) candidate weight
        return jnp.concatenate([wc[:H], zeros_h], axis=0)

    # W1 row-chunks (2H rows each) follow the f1 feature order:
    #   [x|h], A0[x|h], A1[x|h], A0^2[x|h], A1^2[x|h], ...
    # columns: [ gate r/u outputs (2H) | candidate x-contribution (H) ]
    chunks = [jnp.concatenate([e_ru0[0] + e_ru1[0],
                               cand_x(e_c0[0] + e_c1[0])], axis=1)]
    for q in range(1, Q + 1):
        chunks.append(jnp.concatenate([e_ru0[q], cand_x(e_c0[q])], axis=1))
        chunks.append(jnp.concatenate([e_ru1[q], cand_x(e_c1[q])], axis=1))
    w1 = jnp.concatenate(chunks, axis=0)                        # (F1_DIM, 3H)

    # W2 row-chunks (H rows each) follow the f2 feature order: s, A0 s, A1 s, ...
    chunks2 = [e_c0[0][H:] + e_c1[0][H:]]
    for q in range(1, Q + 1):
        chunks2.append(e_c0[q][H:])
        chunks2.append(e_c1[q][H:])
    w2 = jnp.concatenate(chunks2, axis=0)                       # (F2_DIM, H)

    b_all = jnp.concatenate([b_ru, b_c], axis=1)                # (1, 3H)
    return w1, w2, b_all


def _block_diag(a):
    """(steps, BT, N, N) -> (steps*BT*N, BT*N) block-diagonal matrix per step."""
    s = a.shape[0]
    eye_bt = jnp.eye(BT, dtype=a.dtype)
    bd = a[:, :, :, None, :] * eye_bt[None, :, None, :, None]   # (s,BT,N,BT,N)
    return bd.reshape(s * BT * N, BT * N)


# -----------------------------------------------------------------------------
# Wrapper
# -----------------------------------------------------------------------------
@jax.jit
def dcgru_cell(inputs, hx, adj, params):
    """inputs, hx: (B, N*H) ; adj: (B, N, N) -> new_state (B, N*H)."""
    B = inputs.shape[0]
    inp = inputs.reshape(B, N, H).astype(jnp.float32)
    hxr = hx.reshape(B, N, H).astype(jnp.float32)
    adjf = adj.astype(jnp.float32)

    w1, w2, b_all = build_fused_weights(params)

    # pad the batch to a multiple of the per-step batch tile (zero adj -> A'=I,
    # perfectly finite; padded rows are sliced off afterwards).
    b_pad = pl.cdiv(B, BT) * BT
    if b_pad != B:
        pad3 = ((0, b_pad - B), (0, 0), (0, 0))
        inp = jnp.pad(inp, pad3)
        hxr = jnp.pad(hxr, pad3)
        adjf = jnp.pad(adjf, pad3)
    steps = b_pad // BT

    x_rows = inp.reshape(b_pad * N, H)
    h_rows = hxr.reshape(b_pad * N, H)
    adj_bd = _block_diag(adjf.reshape(steps, BT, N, N))
    adjt_bd = _block_diag(jnp.transpose(adjf, (0, 2, 1)).reshape(steps, BT, N, N))

    flops_per_step = (
        2 * (2 * R) * R * (2 * H)             # stage-1 diffusion (both directions, stacked)
        + 2 * R * F1_DIM * 3 * H              # fused gate / candidate-x matmul
        + 2 * (2 * R) * R * H                 # stage-2 diffusion
        + 2 * R * F2_DIM * H                  # candidate h matmul
        + 10 * R * R                          # random-walk normalisation + GRU update
    )
    cost = pl.CostEstimate(
        flops=steps * flops_per_step,
        transcendentals=steps * R * 3 * H,
        bytes_accessed=4 * (b_pad * N * 3 * H + 2 * steps * R * R
                            + F1_DIM * 3 * H + F2_DIM * H + 3 * H),
    )

    out = pl.pallas_call(
        dcgru_cell_kernel,
        out_shape=jax.ShapeDtypeStruct((b_pad * N, H), jnp.float32),
        grid=(steps,),
        in_specs=[
            pl.BlockSpec((R, H), lambda b: (b, 0)),                 # x rows
            pl.BlockSpec((R, H), lambda b: (b, 0)),                 # hx rows
            pl.BlockSpec((R, R), lambda b: (b, 0)),                 # block-diag adj
            pl.BlockSpec((R, R), lambda b: (b, 0)),                 # block-diag adj^T
            pl.BlockSpec((F1_DIM, 3 * H), lambda b: (0, 0)),        # fused W1
            pl.BlockSpec((F2_DIM, H), lambda b: (0, 0)),            # fused W2
            pl.BlockSpec((1, 3 * H), lambda b: (0, 0)),             # fused bias
        ],
        out_specs=pl.BlockSpec((R, H), lambda b: (b, 0)),
        compiler_params=pltpu.CompilerParams(
            dimension_semantics=("parallel",)),
        cost_estimate=cost,
    )(x_rows, h_rows, adj_bd, adjt_bd, w1, w2, b_all)

    return out[:B * N].reshape(B, N * H)


# -----------------------------------------------------------------------------
# Deterministic parameter construction (xavier-normal weights, bias = 0.1).
# nn.Linear(F, out) computes x @ W.T + b with W: (out, F).  We build the
# (F, out) matrix directly and split F = 2H * M (matrix index fastest, matching
# torch's permute(1,2,3,0).reshape flatten) into per-matrix (2H, out) blocks.
# Both Linear branches add a 0.1 bias -> summed bias 0.2.
# -----------------------------------------------------------------------------
def make_params(key):
    F = 2 * H * M

    def xavier(k, fan_in, fan_out):
        std = math.sqrt(2.0 / (fan_in + fan_out))
        return std * jax.random.normal(k, (fan_in, fan_out), jnp.float32)

    def split_w(w):  # (F, out) -> (M, 2H, out)
        return jnp.transpose(w.reshape(2 * H, M, w.shape[-1]), (1, 0, 2))

    k0, k1, k2, k3 = jax.random.split(key, 4)
    w_ru0 = split_w(xavier(k0, F, 2 * H))
    w_ru1 = split_w(xavier(k1, F, 2 * H))
    w_c0 = split_w(xavier(k2, F, H))
    w_c1 = split_w(xavier(k3, F, H))
    b_ru = jnp.full((1, 2 * H), 0.2, jnp.float32)
    b_c = jnp.full((1, H), 0.2, jnp.float32)
    return (w_ru0, w_ru1, b_ru, w_c0, w_c1, b_c)


# -----------------------------------------------------------------------------
# Pure-JAX reference (mirrors the PyTorch forward) for a numerical sanity check
# -----------------------------------------------------------------------------
def reference_cell(inputs, hx, adj, params):
    (w_ru0, w_ru1, b_ru, w_c0, w_c1, b_c) = params
    B = inputs.shape[0]
    inp = inputs.reshape(B, N, H)
    hx3 = hx.reshape(B, N, H)

    def random_walk(a):
        ap = a + jnp.eye(N, dtype=jnp.float32)[None]
        d = jnp.sum(ap, axis=1)
        d_inv = 1.0 / d
        d_inv = jnp.where(jnp.isinf(d_inv), 0.0, d_inv)
        return d_inv[:, :, None] * ap

    a0 = random_walk(adj)
    a1 = random_walk(jnp.transpose(adj, (0, 2, 1)))

    def gconv(state, w0, w1, b):
        x = jnp.concatenate([inp, state], axis=-1)   # (B, N, 2H)
        mats0, mats1 = [x], [x]
        if K >= 1:
            t0 = jnp.einsum('bij,bjf->bif', a0, x)
            t1 = jnp.einsum('bij,bjf->bif', a1, x)
            mats0.append(t0); mats1.append(t1)
            for _ in range(2, K + 1):
                s0 = jnp.einsum('bij,bjf->bif', a0, t0)
                s1 = jnp.einsum('bij,bjf->bif', a1, t1)
                mats0.append(t0); mats1.append(t1)   # reference-code quirk
                t0, t1 = s0, s1
        y = jnp.broadcast_to(b[None], (B, N, b.shape[-1])).astype(jnp.float32)
        for m in range(M):
            y = y + mats0[m] @ w0[m] + mats1[m] @ w1[m]
        return y

    ru = jax.nn.sigmoid(gconv(hx3, w_ru0, w_ru1, b_ru))
    r, u = ru[..., :H], ru[..., H:]
    c = jnp.tanh(gconv(r * hx3, w_c0, w_c1, b_c))
    new_state = u * hx3 + (1.0 - u) * c
    return new_state.reshape(B, N * H)


# TODO(synk): the unused `_fc` path (use_gc_for_ru=False) and the sparse-matrix
# builder are not exercised by this forward and are not implemented.

if __name__ == "__main__":
    key = jax.random.PRNGKey(0)
    k_in, k_hx, k_adj, k_par = jax.random.split(key, 4)
    params = make_params(k_par)

    # B=2: single (padded) grid step; B=10: padding + 2 grid steps.
    for B in (2, 10):
        inputs = jax.random.normal(jax.random.fold_in(k_in, B), (B, N * H), jnp.float32)
        hx = jax.random.normal(jax.random.fold_in(k_hx, B), (B, N * H), jnp.float32)
        adj = jax.random.uniform(jax.random.fold_in(k_adj, B), (B, N, N), jnp.float32)

        new_state = jax.block_until_ready(dcgru_cell(inputs, hx, adj, params))
        ref = jax.block_until_ready(reference_cell(inputs, hx, adj, params))

        assert new_state.shape == (B, N * H)
        assert bool(jnp.all(jnp.isfinite(new_state)))
        assert bool(jnp.allclose(new_state, ref, atol=5e-3, rtol=5e-3)), \
            f"Pallas kernel mismatch vs JAX reference at B={B}"

    print("KERNEL_OK")
</pallas_src>

<mosaic_0001>
module attributes {stable_mosaic.version = 11 : i64} {
  func.func @dcgru_cell_kernel(%arg0: i32, %arg1: memref<128x32xf32, #tpu.memory_space<vmem>>, %arg2: memref<128x32xf32, #tpu.memory_space<vmem>>, %arg3: memref<128x128xf32, #tpu.memory_space<vmem>>, %arg4: memref<128x128xf32, #tpu.memory_space<vmem>>, %arg5: memref<192x96xf32, #tpu.memory_space<vmem>>, %arg6: memref<96x32xf32, #tpu.memory_space<vmem>>, %arg7: memref<1x96xf32, #tpu.memory_space<vmem>>, %arg8: memref<128x32xf32, #tpu.memory_space<vmem>>) attributes {dimension_semantics = [#tpu.dimension_semantics<parallel>], iteration_bounds = array<i64: 1>, scalar_prefetch = 0 : i64, scratch_operands = 0 : i64, tpu.core_type = #tpu.core_type<tc>, window_params = [{transform_indices = @transform_0, window_bounds = array<i64: 128, 32>}, {transform_indices = @transform_1, window_bounds = array<i64: 128, 32>}, {transform_indices = @transform_2, window_bounds = array<i64: 128, 128>}, {transform_indices = @transform_3, window_bounds = array<i64: 128, 128>}, {pipeline_mode = #tpu.pipeline_mode<synchronous>, transform_indices = @transform_4, window_bounds = array<i64: 192, 96>}, {pipeline_mode = #tpu.pipeline_mode<synchronous>, transform_indices = @transform_5, window_bounds = array<i64: 96, 32>}, {pipeline_mode = #tpu.pipeline_mode<synchronous>, transform_indices = @transform_6, window_bounds = array<i64: 1, 96>}, {transform_indices = @transform_7, window_bounds = array<i64: 128, 32>}]} {
    %c0 = arith.constant 0 : index
    %c0_0 = arith.constant 0 : index
    %0 = vector.load %arg1[%c0, %c0_0] : memref<128x32xf32, #tpu.memory_space<vmem>>, vector<128x32xf32>
    %c0_1 = arith.constant 0 : index
    %c0_2 = arith.constant 0 : index
    %1 = vector.load %arg2[%c0_1, %c0_2] : memref<128x32xf32, #tpu.memory_space<vmem>>, vector<128x32xf32>
    %2 = tpu.iota {dimensions = array<i32: 0>} : vector<128x128xi32>
    %3 = tpu.iota {dimensions = array<i32: 1>} : vector<128x128xi32>
    %c0_i32 = arith.constant 0 : i32
    %4 = vector.broadcast %c0_i32 : i32 to vector<128x128xi32>
    %5 = arith.addi %2, %4 : vector<128x128xi32>
    %6 = arith.cmpi eq, %5, %3 : vector<128x128xi32>
    %7 = arith.extui %6 : vector<128x128xi1> to vector<128x128xi32>
    %8 = arith.sitofp %7 : vector<128x128xi32> to vector<128x128xf32>
    %c0_3 = arith.constant 0 : index
    %c0_4 = arith.constant 0 : index
    %9 = vector.load %arg3[%c0_3, %c0_4] : memref<128x128xf32, #tpu.memory_space<vmem>>, vector<128x128xf32>
    %10 = arith.addf %9, %8 : vector<128x128xf32>
    %c0_5 = arith.constant 0 : index
    %c0_6 = arith.constant 0 : index
    %11 = vector.load %arg4[%c0_5, %c0_6] : memref<128x128xf32, #tpu.memory_space<vmem>>, vector<128x128xf32>
    %12 = arith.addf %11, %8 : vector<128x128xf32>
    %cst = arith.constant dense<0.000000e+00> : vector<128xf32>
    %13 = vector.multi_reduction <add>, %12, %cst [1] : vector<128x128xf32> to vector<128xf32>
    %14 = vector.shape_cast %13 : vector<128xf32> to vector<128x1xf32>
    %cst_7 = arith.constant dense<0.000000e+00> : vector<128xf32>
    %15 = vector.multi_reduction <add>, %10, %cst_7 [1] : vector<128x128xf32> to vector<128xf32>
    %16 = vector.shape_cast %15 : vector<128xf32> to vector<128x1xf32>
    %cst_8 = arith.constant 1.000000e+00 : f32
    %17 = vector.broadcast %cst_8 : f32 to vector<128x1xf32>
    %18 = arith.divf %17, %14 : vector<128x1xf32>
    %19 = math.absf %18 : vector<128x1xf32>
    %cst_9 = arith.constant 0x7F800000 : f32
    %20 = vector.broadcast %cst_9 : f32 to vector<128x1xf32>
    %21 = arith.cmpf oeq, %19, %20 : vector<128x1xf32>
    %cst_10 = arith.constant 0.000000e+00 : f32
    %22 = vector.broadcast %cst_10 : f32 to vector<128x1xf32>
    %23 = arith.select %21, %22, %18 : vector<128x1xi1>, vector<128x1xf32>
    %cst_11 = arith.constant 1.000000e+00 : f32
    %24 = vector.broadcast %cst_11 : f32 to vector<128x1xf32>
    %25 = arith.divf %24, %16 : vector<128x1xf32>
    %26 = math.absf %25 : vector<128x1xf32>
    %cst_12 = arith.constant 0x7F800000 : f32
    %27 = vector.broadcast %cst_12 : f32 to vector<128x1xf32>
    %28 = arith.cmpf oeq, %26, %27 : vector<128x1xf32>
    %cst_13 = arith.constant 0.000000e+00 : f32
    %29 = vector.broadcast %cst_13 : f32 to vector<128x1xf32>
    %30 = arith.select %28, %29, %25 : vector<128x1xi1>, vector<128x1xf32>
    %31 = vector.broadcast %23 : vector<128x1xf32> to vector<128x128xf32>
    %32 = arith.mulf %31, %10 : vector<128x128xf32>
    %33 = vector.broadcast %30 : vector<128x1xf32> to vector<128x128xf32>
    %34 = arith.mulf %33, %12 : vector<128x128xf32>
    %35 = tpu.concatenate %32, %34 in 0 : vector<128x128xf32>, vector<128x128xf32> -> vector<256x128xf32>
    %36 = tpu.concatenate %0, %1 in 1 : vector<128x32xf32>, vector<128x32xf32> -> vector<128x64xf32>
    %cst_14 = arith.constant dense<0.000000e+00> : vector<256x64xf32>
    %37 = tpu.matmul %35, %36, %cst_14 {dimension_numbers = #tpu.dot_dimension_numbers<[1], [0], [0], [1], [0, 0, 1, 1], [], []>} : vector<256x128xf32>, vector<128x64xf32>, vector<256x64xf32> -> vector<256x64xf32>
    %38 = vector.extract_strided_slice %37 {offsets = [0, 0], sizes = [128, 64], strides = [1, 1]} : vector<256x64xf32> to vector<128x64xf32>
    %39 = vector.extract_strided_slice %37 {offsets = [128, 0], sizes = [128, 64], strides = [1, 1]} : vector<256x64xf32> to vector<128x64xf32>
    %40 = tpu.concatenate %36, %38, %39 in 1 : vector<128x64xf32>, vector<128x64xf32>, vector<128x64xf32> -> vector<128x192xf32>
    %c0_15 = arith.constant 0 : index
    %c0_16 = arith.constant 0 : index
    %41 = vector.load %arg5[%c0_15, %c0_16] : memref<192x96xf32, #tpu.memory_space<vmem>>, vector<192x96xf32>
    %cst_17 = arith.constant dense<0.000000e+00> : vector<128x96xf32>
    %42 = tpu.matmul %40, %41, %cst_17 {dimension_numbers = #tpu.dot_dimension_numbers<[1], [0], [0], [1], [0, 0, 1, 1], [], []>} : vector<128x192xf32>, vector<192x96xf32>, vector<128x96xf32> -> vector<128x96xf32>
    %c0_18 = arith.constant 0 : index
    %c0_19 = arith.constant 0 : index
    %43 = vector.load %arg7[%c0_18, %c0_19] : memref<1x96xf32, #tpu.memory_space<vmem>>, vector<1x96xf32>
    %44 = vector.broadcast %43 : vector<1x96xf32> to vector<128x96xf32>
    %45 = arith.addf %42, %44 : vector<128x96xf32>
    %46 = vector.extract_strided_slice %45 {offsets = [0, 0], sizes = [128, 64], strides = [1, 1]} : vector<128x96xf32> to vector<128x64xf32>
    %47 = arith.negf %46 : vector<128x64xf32>
    %48 = math.exp %47 : vector<128x64xf32>
    %cst_20 = arith.constant 1.000000e+00 : f32
    %49 = vector.broadcast %cst_20 : f32 to vector<128x64xf32>
    %50 = arith.addf %49, %48 : vector<128x64xf32>
    %51 = arith.divf %49, %50 : vector<128x64xf32>
    %52 = vector.extract_strided_slice %51 {offsets = [0, 0], sizes = [128, 32], strides = [1, 1]} : vector<128x64xf32> to vector<128x32xf32>
    %53 = vector.extract_strided_slice %51 {offsets = [0, 32], sizes = [128, 32], strides = [1, 1]} : vector<128x64xf32> to vector<128x32xf32>
    %54 = arith.mulf %52, %1 : vector<128x32xf32>
    %cst_21 = arith.constant dense<0.000000e+00> : vector<256x32xf32>
    %55 = tpu.matmul %35, %54, %cst_21 {dimension_numbers = #tpu.dot_dimension_numbers<[1], [0], [0], [1], [0, 0, 1, 1], [], []>} : vector<256x128xf32>, vector<128x32xf32>, vector<256x32xf32> -> vector<256x32xf32>
    %56 = vector.extract_strided_slice %55 {offsets = [0, 0], sizes = [128, 32], strides = [1, 1]} : vector<256x32xf32> to vector<128x32xf32>
    %57 = vector.extract_strided_slice %55 {offsets = [128, 0], sizes = [128, 32], strides = [1, 1]} : vector<256x32xf32> to vector<128x32xf32>
    %58 = tpu.concatenate %54, %56, %57 in 1 : vector<128x32xf32>, vector<128x32xf32>, vector<128x32xf32> -> vector<128x96xf32>
    %59 = vector.extract_strided_slice %45 {offsets = [0, 64], sizes = [128, 32], strides = [1, 1]} : vector<128x96xf32> to vector<128x32xf32>
    %c0_22 = arith.constant 0 : index
    %c0_23 = arith.constant 0 : index
    %60 = vector.load %arg6[%c0_22, %c0_23] : memref<96x32xf32, #tpu.memory_space<vmem>>, vector<96x32xf32>
    %cst_24 = arith.constant dense<0.000000e+00> : vector<128x32xf32>
    %61 = tpu.matmul %58, %60, %cst_24 {dimension_numbers = #tpu.dot_dimension_numbers<[1], [0], [0], [1], [0, 0, 1, 1], [], []>} : vector<128x96xf32>, vector<96x32xf32>, vector<128x32xf32> -> vector<128x32xf32>
    %62 = arith.addf %59, %61 : vector<128x32xf32>
    %63 = math.tanh %62 : vector<128x32xf32>
    %64 = arith.mulf %53, %1 : vector<128x32xf32>
    %cst_25 = arith.constant 1.000000e+00 : f32
    %65 = vector.broadcast %cst_25 : f32 to vector<128x32xf32>
    %66 = arith.subf %65, %53 : vector<128x32xf32>
    %67 = arith.mulf %66, %63 : vector<128x32xf32>
    %68 = arith.addf %64, %67 : vector<128x32xf32>
    %c0_26 = arith.constant 0 : index
    %c0_27 = arith.constant 0 : index
    %69 = vector.load %arg8[%c0_26, %c0_27] : memref<128x32xf32, #tpu.memory_space<vmem>>, vector<128x32xf32>
    tpu.vector_store %arg8[%c0_26, %c0_27], %68 {strides = array<i32>} : memref<128x32xf32, #tpu.memory_space<vmem>>, vector<128x32xf32>,
    return
  }
  func.func @transform_0(%arg0: i32) -> (i32, i32) {
    %c0_i32 = arith.constant 0 : i32
    %c0_i32_0 = arith.constant 0 : i32
    return %arg0, %c0_i32 : i32, i32
  }
  func.func @transform_1(%arg0: i32) -> (i32, i32) {
    %c0_i32 = arith.constant 0 : i32
    %c0_i32_0 = arith.constant 0 : i32
    return %arg0, %c0_i32 : i32, i32
  }
  func.func @transform_2(%arg0: i32) -> (i32, i32) {
    %c0_i32 = arith.constant 0 : i32
    %c0_i32_0 = arith.constant 0 : i32
    return %arg0, %c0_i32 : i32, i32
  }
  func.func @transform_3(%arg0: i32) -> (i32, i32) {
    %c0_i32 = arith.constant 0 : i32
    %c0_i32_0 = arith.constant 0 : i32
    return %arg0, %c0_i32 : i32, i32
  }
  func.func @transform_4(%arg0: i32) -> (i32, i32) {
    %c0_i32 = arith.constant 0 : i32
    %c0_i32_0 = arith.constant 0 : i32
    %c0_i32_1 = arith.constant 0 : i32
    return %c0_i32, %c0_i32_0 : i32, i32
  }
  func.func @transform_5(%arg0: i32) -> (i32, i32) {
    %c0_i32 = arith.constant 0 : i32
    %c0_i32_0 = arith.constant 0 : i32
    %c0_i32_1 = arith.constant 0 : i32
    return %c0_i32, %c0_i32_0 : i32, i32
  }
  func.func @transform_6(%arg0: i32) -> (i32, i32) {
    %c0_i32 = arith.constant 0 : i32
    %c0_i32_0 = arith.constant 0 : i32
    %c0_i32_1 = arith.constant 0 : i32
    return %c0_i32, %c0_i32_0 : i32, i32
  }
  func.func @transform_7(%arg0: i32) -> (i32, i32) {
    %c0_i32 = arith.constant 0 : i32
    %c0_i32_0 = arith.constant 0 : i32
    return %arg0, %c0_i32 : i32, i32
  }
}

</mosaic_0001>

<llo_original>
// kernel: dcgru_cell.1
$region0: #{dcgru_cell.1}
  #allocation0 [shape = 'u32[]', space=smem, size = 0x4, offset = 0x4, fixed_abs, tag = 'smem constant byte address 0x4 - core index']
  #allocation1 [shape = 'u32[144,128]{1,0:T(1,128)}', space=vmem, size = 0x12000, scoped, tag = 'internal scratch']
  %s0 = inlined_call_operand.vmem [shape: f32[128,32], index: 0, kind: input, shape index: {}]
  %s1 = inlined_call_operand.vmem [shape: f32[128,32], index: 1, kind: input, shape index: {}]
  %s2 = inlined_call_operand.vmem [shape: f32[128,128], index: 2, kind: input, shape index: {}]
  %s3 = inlined_call_operand.vmem [shape: f32[128,128], index: 3, kind: input, shape index: {}]
  %s4 = inlined_call_operand.vmem [shape: f32[192,96], index: 4, kind: input, shape index: {}]
  %s5 = inlined_call_operand.vmem [shape: f32[96,32], index: 5, kind: input, shape index: {}]
  %s6 = inlined_call_operand.vmem [shape: f32[1,96], index: 6, kind: input, shape index: {}]
  %s7 = inlined_call_operand.vmem [shape: f32[128,32], index: 7, kind: output, shape index: {}]
  %s8 = sld [smem:[#allocation0]]
  $region38: #{dcgru_cell.1} parent=0
    _
  %s10 = ssub.s32 1, %s8
  %s11 = scalar_select 0, %s10, %s8
  // Predicated region
  $region2: #{dcgru_cell.1} parent=0 // pred_check
    _
  $region3: #{dcgru_cell.1} parent=0 // pred_check_branch
    %13 = sbr.rel (0) target = $region5
  $region4: #{dcgru_cell.1} parent=0 // pred_region
    _
  $region5: #{dcgru_cell.1} parent=0 // pred_fallthru
    _
  // Predicated region
  $region6: #{dcgru_cell.1} parent=0 // pred_check
    _
  $region7: #{dcgru_cell.1} parent=0 // pred_check_branch
    %15 = sbr.rel (0) target = $region9
  $region8: #{dcgru_cell.1} parent=0 // pred_region
    _
  $region9: #{dcgru_cell.1} parent=0 // pred_fallthru
    _
  // Predicated region
  $region10: #{dcgru_cell.1} parent=0 // pred_check
    _
  $region11: #{dcgru_cell.1} parent=0 // pred_check_branch
    %17 = sbr.rel (0) target = $region13
  $region12: #{dcgru_cell.1} parent=0 // pred_region
    _
  $region13: #{dcgru_cell.1} parent=0 // pred_fallthru
    _
  // Predicated region
  $region14: #{dcgru_cell.1} parent=0 // pred_check
    _
  $region15: #{dcgru_cell.1} parent=0 // pred_check_branch
    %19 = sbr.rel (0) target = $region17
  $region16: #{dcgru_cell.1} parent=0 // pred_region
    _
  $region17: #{dcgru_cell.1} parent=0 // pred_fallthru
    _
  // Predicated region
  $region18: #{dcgru_cell.1} parent=0 // pred_check
    _
  $region19: #{dcgru_cell.1} parent=0 // pred_check_branch
    %21 = sbr.rel (0) target = $region21
  $region20: #{dcgru_cell.1} parent=0 // pred_region
    _
  $region21: #{dcgru_cell.1} parent=0 // pred_fallthru
    _
  // Predicated region
  $region22: #{dcgru_cell.1} parent=0 // pred_check
    _
  $region23: #{dcgru_cell.1} parent=0 // pred_check_branch
    %23 = sbr.rel (0) target = $region25
  $region24: #{dcgru_cell.1} parent=0 // pred_region
    _
  $region25: #{dcgru_cell.1} parent=0 // pred_fallthru
    _
  // Predicated region
  $region26: #{dcgru_cell.1} parent=0 // pred_check
    _
  $region27: #{dcgru_cell.1} parent=0 // pred_check_branch
    %25 = sbr.rel (0) target = $region29
  $region28: #{dcgru_cell.1} parent=0 // pred_region
    _
  $region29: #{dcgru_cell.1} parent=0 // pred_fallthru
    _
  %v26 = vld [vmem:[%s0] sm:$0xff]
  %v27 = vld [vmem:[%s0 + $0x8] sm:$0xff]
  %v28 = vld [vmem:[%s0 + $0x10] sm:$0xff]
  %v29 = vld [vmem:[%s0 + $0x18] sm:$0xff]
  %v30 = vld [vmem:[%s0 + $0x20] sm:$0xff]
  %v31 = vld [vmem:[%s0 + $0x28] sm:$0xff]
  %v32 = vld [vmem:[%s0 + $0x30] sm:$0xff]
  %v33 = vld [vmem:[%s0 + $0x38] sm:$0xff]
  %v34 = vld [vmem:[%s0 + $0x40] sm:$0xff]
  %v35 = vld [vmem:[%s0 + $0x48] sm:$0xff]
  %v36 = vld [vmem:[%s0 + $0x50] sm:$0xff]
  %v37 = vld [vmem:[%s0 + $0x58] sm:$0xff]
  %v38 = vld [vmem:[%s0 + $0x60] sm:$0xff]
  %v39 = vld [vmem:[%s0 + $0x68] sm:$0xff]
  %v40 = vld [vmem:[%s0 + $0x70] sm:$0xff]
  %v41 = vld [vmem:[%s0 + $0x78] sm:$0xff]
  %v42 = vld [vmem:[%s1] sm:$0xff]
  %v43 = vld [vmem:[%s1 + $0x8] sm:$0xff]
  %v44 = vld [vmem:[%s1 + $0x10] sm:$0xff]
  %v45 = vld [vmem:[%s1 + $0x18] sm:$0xff]
  %v46 = vld [vmem:[%s1 + $0x20] sm:$0xff]
  %v47 = vld [vmem:[%s1 + $0x28] sm:$0xff]
  %v48 = vld [vmem:[%s1 + $0x30] sm:$0xff]
  %v49 = vld [vmem:[%s1 + $0x38] sm:$0xff]
  %v50 = vld [vmem:[%s1 + $0x40] sm:$0xff]
  %v51 = vld [vmem:[%s1 + $0x48] sm:$0xff]
  %v52 = vld [vmem:[%s1 + $0x50] sm:$0xff]
  %v53 = vld [vmem:[%s1 + $0x58] sm:$0xff]
  %v54 = vld [vmem:[%s1 + $0x60] sm:$0xff]
  %v55 = vld [vmem:[%s1 + $0x68] sm:$0xff]
  %v56 = vld [vmem:[%s1 + $0x70] sm:$0xff]
  %v57 = vld [vmem:[%s1 + $0x78] sm:$0xff]
  %v58 = vlaneseq
  %v59 = vshrl.u32 %v58, 7
  %v60 = vadd.s32 %v59, 8
  %v61 = vadd.s32 %v59, 16
  %v62 = vadd.s32 %v59, 24
  %v63 = vadd.s32 %v59, 32
  %v64 = vadd.s32 %v59, 40
  %v65 = vadd.s32 %v59, 48
  %v66 = vadd.s32 %v59, 56
  %v67 = vadd.s32 %v59, 64
  %v68 = vadd.s32 %v59, 72
  %v69 = vadd.s32 %v59, 80
  %v70 = vadd.s32 %v59, 88
  %v71 = vadd.s32 %v59, 96
  %v72 = vadd.s32 %v59, 104
  %v73 = vadd.s32 %v59, 112
  %v74 = vadd.s32 %v59, 120
  %v75 = vlaneseq
  %v76 = vand.u32 %v75, 127
  %vm77 = vcmp.eq.s32.totalorder %v59, %v76
  %vm78 = vcmp.eq.s32.totalorder %v60, %v76
  %vm79 = vcmp.eq.s32.totalorder %v61, %v76
  %vm80 = vcmp.eq.s32.totalorder %v62, %v76
  %vm81 = vcmp.eq.s32.totalorder %v63, %v76
  %vm82 = vcmp.eq.s32.totalorder %v64, %v76
  %vm83 = vcmp.eq.s32.totalorder %v65, %v76
  %vm84 = vcmp.eq.s32.totalorder %v66, %v76
  %vm85 = vcmp.eq.s32.totalorder %v67, %v76
  %vm86 = vcmp.eq.s32.totalorder %v68, %v76
  %vm87 = vcmp.eq.s32.totalorder %v69, %v76
  %vm88 = vcmp.eq.s32.totalorder %v70, %v76
  %vm89 = vcmp.eq.s32.totalorder %v71, %v76
  %vm90 = vcmp.eq.s32.totalorder %v72, %v76
  %vm91 = vcmp.eq.s32.totalorder %v73, %v76
  %vm92 = vcmp.eq.s32.totalorder %v74, %v76
  %v93 = vsel %vm77, 1, 0
  %v94 = vsel %vm78, 1, 0
  %v95 = vsel %vm79, 1, 0
  %v96 = vsel %vm80, 1, 0
  %v97 = vsel %vm81, 1, 0
  %v98 = vsel %vm82, 1, 0
  %v99 = vsel %vm83, 1, 0
  %v100 = vsel %vm84, 1, 0
  %v101 = vsel %vm85, 1, 0
  %v102 = vsel %vm86, 1, 0
  %v103 = vsel %vm87, 1, 0
  %v104 = vsel %vm88, 1, 0
  %v105 = vsel %vm89, 1, 0
  %v106 = vsel %vm90, 1, 0
  %v107 = vsel %vm91, 1, 0
  %v108 = vsel %vm92, 1, 0
  %v109 = vcvt.s32.f32 %v93
  %v110 = vcvt.s32.f32 %v94
  %v111 = vcvt.s32.f32 %v95
  %v112 = vcvt.s32.f32 %v96
  %v113 = vcvt.s32.f32 %v97
  %v114 = vcvt.s32.f32 %v98
  %v115 = vcvt.s32.f32 %v99
  %v116 = vcvt.s32.f32 %v100
  %v117 = vcvt.s32.f32 %v101
  %v118 = vcvt.s32.f32 %v102
  %v119 = vcvt.s32.f32 %v103
  %v120 = vcvt.s32.f32 %v104
  %v121 = vcvt.s32.f32 %v105
  %v122 = vcvt.s32.f32 %v106
  %v123 = vcvt.s32.f32 %v107
  %v124 = vcvt.s32.f32 %v108
  %v125 = vld [vmem:[%s2] sm:$0xff]
  %v126 = vld [vmem:[%s2 + $0x8] sm:$0xff]
  %v127 = vld [vmem:[%s2 + $0x10] sm:$0xff]
  %v128 = vld [vmem:[%s2 + $0x18] sm:$0xff]
  %v129 = vld [vmem:[%s2 + $0x20] sm:$0xff]
  %v130 = vld [vmem:[%s2 + $0x28] sm:$0xff]
  %v131 = vld [vmem:[%s2 + $0x30] sm:$0xff]
  %v132 = vld [vmem:[%s2 + $0x38] sm:$0xff]
  %v133 = vld [vmem:[%s2 + $0x40] sm:$0xff]
  %v134 = vld [vmem:[%s2 + $0x48] sm:$0xff]
  %v135 = vld [vmem:[%s2 + $0x50] sm:$0xff]
  %v136 = vld [vmem:[%s2 + $0x58] sm:$0xff]
  %v137 = vld [vmem:[%s2 + $0x60] sm:$0xff]
  %v138 = vld [vmem:[%s2 + $0x68] sm:$0xff]
  %v139 = vld [vmem:[%s2 + $0x70] sm:$0xff]
  %v140 = vld [vmem:[%s2 + $0x78] sm:$0xff]
  %v141 = vadd.f32 %v125, %v109
  %v142 = vadd.f32 %v126, %v110
  %v143 = vadd.f32 %v127, %v111
  %v144 = vadd.f32 %v128, %v112
  %v145 = vadd.f32 %v129, %v113
  %v146 = vadd.f32 %v130, %v114
  %v147 = vadd.f32 %v131, %v115
  %v148 = vadd.f32 %v132, %v116
  %v149 = vadd.f32 %v133, %v117
  %v150 = vadd.f32 %v134, %v118
  %v151 = vadd.f32 %v135, %v119
  %v152 = vadd.f32 %v136, %v120
  %v153 = vadd.f32 %v137, %v121
  %v154 = vadd.f32 %v138, %v122
  %v155 = vadd.f32 %v139, %v123
  %v156 = vadd.f32 %v140, %v124
  %v157 = vld [vmem:[%s3] sm:$0xff]
  %v158 = vld [vmem:[%s3 + $0x8] sm:$0xff]
  %v159 = vld [vmem:[%s3 + $0x10] sm:$0xff]
  %v160 = vld [vmem:[%s3 + $0x18] sm:$0xff]
  %v161 = vld [vmem:[%s3 + $0x20] sm:$0xff]
  %v162 = vld [vmem:[%s3 + $0x28] sm:$0xff]
  %v163 = vld [vmem:[%s3 + $0x30] sm:$0xff]
  %v164 = vld [vmem:[%s3 + $0x38] sm:$0xff]
  %v165 = vld [vmem:[%s3 + $0x40] sm:$0xff]
  %v166 = vld [vmem:[%s3 + $0x48] sm:$0xff]
  %v167 = vld [vmem:[%s3 + $0x50] sm:$0xff]
  %v168 = vld [vmem:[%s3 + $0x58] sm:$0xff]
  %v169 = vld [vmem:[%s3 + $0x60] sm:$0xff]
  %v170 = vld [vmem:[%s3 + $0x68] sm:$0xff]
  %v171 = vld [vmem:[%s3 + $0x70] sm:$0xff]
  %v172 = vld [vmem:[%s3 + $0x78] sm:$0xff]
  %v173 = vadd.f32 %v157, %v109
  %v174 = vadd.f32 %v158, %v110
  %v175 = vadd.f32 %v159, %v111
  %v176 = vadd.f32 %v160, %v112
  %v177 = vadd.f32 %v161, %v113
  %v178 = vadd.f32 %v162, %v114
  %v179 = vadd.f32 %v163, %v115
  %v180 = vadd.f32 %v164, %v116
  %v181 = vadd.f32 %v165, %v117
  %v182 = vadd.f32 %v166, %v118
  %v183 = vadd.f32 %v167, %v119
  %v184 = vadd.f32 %v168, %v120
  %v185 = vadd.f32 %v169, %v121
  %v186 = vadd.f32 %v170, %v122
  %v187 = vadd.f32 %v171, %v123
  %v188 = vadd.f32 %v172, %v124
  %189 = vadd.xlane.f32.xlu0 %v173
  %v190 = vpop.xlane.xlu0 %189
  %191 = vadd.xlane.f32.xlu0 %v174
  %v192 = vpop.xlane.xlu0 %191
  %193 = vadd.xlane.f32.xlu0 %v175
  %v194 = vpop.xlane.xlu0 %193
  %195 = vadd.xlane.f32.xlu0 %v176
  %v196 = vpop.xlane.xlu0 %195
  %197 = vadd.xlane.f32.xlu0 %v177
  %v198 = vpop.xlane.xlu0 %197
  %199 = vadd.xlane.f32.xlu0 %v178
  %v200 = vpop.xlane.xlu0 %199
  %201 = vadd.xlane.f32.xlu0 %v179
  %v202 = vpop.xlane.xlu0 %201
  %203 = vadd.xlane.f32.xlu0 %v180
  %v204 = vpop.xlane.xlu0 %203
  %205 = vadd.xlane.f32.xlu0 %v181
  %v206 = vpop.xlane.xlu0 %205
  %207 = vadd.xlane.f32.xlu0 %v182
  %v208 = vpop.xlane.xlu0 %207
  %209 = vadd.xlane.f32.xlu0 %v183
  %v210 = vpop.xlane.xlu0 %209
  %211 = vadd.xlane.f32.xlu0 %v184
  %v212 = vpop.xlane.xlu0 %211
  %213 = vadd.xlane.f32.xlu0 %v185
  %v214 = vpop.xlane.xlu0 %213
  %215 = vadd.xlane.f32.xlu0 %v186
  %v216 = vpop.xlane.xlu0 %215
  %217 = vadd.xlane.f32.xlu0 %v187
  %v218 = vpop.xlane.xlu0 %217
  %219 = vadd.xlane.f32.xlu0 %v188
  %v220 = vpop.xlane.xlu0 %219
  %221 = vadd.xlane.f32.xlu0 %v141
  %v222 = vpop.xlane.xlu0 %221
  %223 = vadd.xlane.f32.xlu0 %v142
  %v224 = vpop.xlane.xlu0 %223
  %225 = vadd.xlane.f32.xlu0 %v143
  %v226 = vpop.xlane.xlu0 %225
  %227 = vadd.xlane.f32.xlu0 %v144
  %v228 = vpop.xlane.xlu0 %227
  %229 = vadd.xlane.f32.xlu0 %v145
  %v230 = vpop.xlane.xlu0 %229
  %231 = vadd.xlane.f32.xlu0 %v146
  %v232 = vpop.xlane.xlu0 %231
  %233 = vadd.xlane.f32.xlu0 %v147
  %v234 = vpop.xlane.xlu0 %233
  %235 = vadd.xlane.f32.xlu0 %v148
  %v236 = vpop.xlane.xlu0 %235
  %237 = vadd.xlane.f32.xlu0 %v149
  %v238 = vpop.xlane.xlu0 %237
  %239 = vadd.xlane.f32.xlu0 %v150
  %v240 = vpop.xlane.xlu0 %239
  %241 = vadd.xlane.f32.xlu0 %v151
  %v242 = vpop.xlane.xlu0 %241
  %243 = vadd.xlane.f32.xlu0 %v152
  %v244 = vpop.xlane.xlu0 %243
  %245 = vadd.xlane.f32.xlu0 %v153
  %v246 = vpop.xlane.xlu0 %245
  %247 = vadd.xlane.f32.xlu0 %v154
  %v248 = vpop.xlane.xlu0 %247
  %249 = vadd.xlane.f32.xlu0 %v155
  %v250 = vpop.xlane.xlu0 %249
  %251 = vadd.xlane.f32.xlu0 %v156
  %v252 = vpop.xlane.xlu0 %251
  %v253 = vrcp.pop %v190
  %v254 = vmul.f32 1.0, %v253
  %v255 = vrcp.pop %v192
  %v256 = vmul.f32 1.0, %v255
  %v257 = vrcp.pop %v194
  %v258 = vmul.f32 1.0, %v257
  %v259 = vrcp.pop %v196
  %v260 = vmul.f32 1.0, %v259
  %v261 = vrcp.pop %v198
  %v262 = vmul.f32 1.0, %v261
  %v263 = vrcp.pop %v200
  %v264 = vmul.f32 1.0, %v263
  %v265 = vrcp.pop %v202
  %v266 = vmul.f32 1.0, %v265
  %v267 = vrcp.pop %v204
  %v268 = vmul.f32 1.0, %v267
  %v269 = vrcp.pop %v206
  %v270 = vmul.f32 1.0, %v269
  %v271 = vrcp.pop %v208
  %v272 = vmul.f32 1.0, %v271
  %v273 = vrcp.pop %v210
  %v274 = vmul.f32 1.0, %v273
  %v275 = vrcp.pop %v212
  %v276 = vmul.f32 1.0, %v275
  %v277 = vrcp.pop %v214
  %v278 = vmul.f32 1.0, %v277
  %v279 = vrcp.pop %v216
  %v280 = vmul.f32 1.0, %v279
  %v281 = vrcp.pop %v218
  %v282 = vmul.f32 1.0, %v281
  %v283 = vrcp.pop %v220
  %v284 = vmul.f32 1.0, %v283
  %v285 = vand.u32 2147483647, %v254
  %v286 = vand.u32 2147483647, %v256
  %v287 = vand.u32 2147483647, %v258
  %v288 = vand.u32 2147483647, %v260
  %v289 = vand.u32 2147483647, %v262
  %v290 = vand.u32 2147483647, %v264
  %v291 = vand.u32 2147483647, %v266
  %v292 = vand.u32 2147483647, %v268
  %v293 = vand.u32 2147483647, %v270
  %v294 = vand.u32 2147483647, %v272
  %v295 = vand.u32 2147483647, %v274
  %v296 = vand.u32 2147483647, %v276
  %v297 = vand.u32 2147483647, %v278
  %v298 = vand.u32 2147483647, %v280
  %v299 = vand.u32 2147483647, %v282
  %v300 = vand.u32 2147483647, %v284
  %vm301 = vcmp.eq.f32.partialorder %v285, inf
  %vm302 = vcmp.eq.f32.partialorder %v286, inf
  %vm303 = vcmp.eq.f32.partialorder %v287, inf
  %vm304 = vcmp.eq.f32.partialorder %v288, inf
  %vm305 = vcmp.eq.f32.partialorder %v289, inf
  %vm306 = vcmp.eq.f32.partialorder %v290, inf
  %vm307 = vcmp.eq.f32.partialorder %v291, inf
  %vm308 = vcmp.eq.f32.partialorder %v292, inf
  %vm309 = vcmp.eq.f32.partialorder %v293, inf
  %vm310 = vcmp.eq.f32.partialorder %v294, inf
  %vm311 = vcmp.eq.f32.partialorder %v295, inf
  %vm312 = vcmp.eq.f32.partialorder %v296, inf
  %vm313 = vcmp.eq.f32.partialorder %v297, inf
  %vm314 = vcmp.eq.f32.partialorder %v298, inf
  %vm315 = vcmp.eq.f32.partialorder %v299, inf
  %vm316 = vcmp.eq.f32.partialorder %v300, inf
  %v317 = vsel %vm301, 0.0, %v254
  %v318 = vsel %vm302, 0.0, %v256
  %v319 = vsel %vm303, 0.0, %v258
  %v320 = vsel %vm304, 0.0, %v260
  %v321 = vsel %vm305, 0.0, %v262
  %v322 = vsel %vm306, 0.0, %v264
  %v323 = vsel %vm307, 0.0, %v266
  %v324 = vsel %vm308, 0.0, %v268
  %v325 = vsel %vm309, 0.0, %v270
  %v326 = vsel %vm310, 0.0, %v272
  %v327 = vsel %vm311, 0.0, %v274
  %v328 = vsel %vm312, 0.0, %v276
  %v329 = vsel %vm313, 0.0, %v278
  %v330 = vsel %vm314, 0.0, %v280
  %v331 = vsel %vm315, 0.0, %v282
  %v332 = vsel %vm316, 0.0, %v284
  %v333 = vrcp.pop %v222
  %v334 = vmul.f32 1.0, %v333
  %v335 = vrcp.pop %v224
  %v336 = vmul.f32 1.0, %v335
  %v337 = vrcp.pop %v226
  %v338 = vmul.f32 1.0, %v337
  %v339 = vrcp.pop %v228
  %v340 = vmul.f32 1.0, %v339
  %v341 = vrcp.pop %v230
  %v342 = vmul.f32 1.0, %v341
  %v343 = vrcp.pop %v232
  %v344 = vmul.f32 1.0, %v343
  %v345 = vrcp.pop %v234
  %v346 = vmul.f32 1.0, %v345
  %v347 = vrcp.pop %v236
  %v348 = vmul.f32 1.0, %v347
  %v349 = vrcp.pop %v238
  %v350 = vmul.f32 1.0, %v349
  %v351 = vrcp.pop %v240
  %v352 = vmul.f32 1.0, %v351
  %v353 = vrcp.pop %v242
  %v354 = vmul.f32 1.0, %v353
  %v355 = vrcp.pop %v244
  %v356 = vmul.f32 1.0, %v355
  %v357 = vrcp.pop %v246
  %v358 = vmul.f32 1.0, %v357
  %v359 = vrcp.pop %v248
  %v360 = vmul.f32 1.0, %v359
  %v361 = vrcp.pop %v250
  %v362 = vmul.f32 1.0, %v361
  %v363 = vrcp.pop %v252
  %v364 = vmul.f32 1.0, %v363
  %v365 = vand.u32 2147483647, %v334
  %v366 = vand.u32 2147483647, %v336
  %v367 = vand.u32 2147483647, %v338
  %v368 = vand.u32 2147483647, %v340
  %v369 = vand.u32 2147483647, %v342
  %v370 = vand.u32 2147483647, %v344
  %v371 = vand.u32 2147483647, %v346
  %v372 = vand.u32 2147483647, %v348
  %v373 = vand.u32 2147483647, %v350
  %v374 = vand.u32 2147483647, %v352
  %v375 = vand.u32 2147483647, %v354
  %v376 = vand.u32 2147483647, %v356
  %v377 = vand.u32 2147483647, %v358
  %v378 = vand.u32 2147483647, %v360
  %v379 = vand.u32 2147483647, %v362
  %v380 = vand.u32 2147483647, %v364
  %vm381 = vcmp.eq.f32.partialorder %v365, inf
  %vm382 = vcmp.eq.f32.partialorder %v366, inf
  %vm383 = vcmp.eq.f32.partialorder %v367, inf
  %vm384 = vcmp.eq.f32.partialorder %v368, inf
  %vm385 = vcmp.eq.f32.partialorder %v369, inf
  %vm386 = vcmp.eq.f32.partialorder %v370, inf
  %vm387 = vcmp.eq.f32.partialorder %v371, inf
  %vm388 = vcmp.eq.f32.partialorder %v372, inf
  %vm389 = vcmp.eq.f32.partialorder %v373, inf
  %vm390 = vcmp.eq.f32.partialorder %v374, inf
  %vm391 = vcmp.eq.f32.partialorder %v375, inf
  %vm392 = vcmp.eq.f32.partialorder %v376, inf
  %vm393 = vcmp.eq.f32.partialorder %v377, inf
  %vm394 = vcmp.eq.f32.partialorder %v378, inf
  %vm395 = vcmp.eq.f32.partialorder %v379, inf
  %vm396 = vcmp.eq.f32.partialorder %v380, inf
  %v397 = vsel %vm381, 0.0, %v334
  %v398 = vsel %vm382, 0.0, %v336
  %v399 = vsel %vm383, 0.0, %v338
  %v400 = vsel %vm384, 0.0, %v340
  %v401 = vsel %vm385, 0.0, %v342
  %v402 = vsel %vm386, 0.0, %v344
  %v403 = vsel %vm387, 0.0, %v346
  %v404 = vsel %vm388, 0.0, %v348
  %v405 = vsel %vm389, 0.0, %v350
  %v406 = vsel %vm390, 0.0, %v352
  %v407 = vsel %vm391, 0.0, %v354
  %v408 = vsel %vm392, 0.0, %v356
  %v409 = vsel %vm393, 0.0, %v358
  %v410 = vsel %vm394, 0.0, %v360
  %v411 = vsel %vm395, 0.0, %v362
  %v412 = vsel %vm396, 0.0, %v364
  %v413 = vmul.f32 %v317, %v141
  %v414 = vmul.f32 %v318, %v142
  %v415 = vmul.f32 %v319, %v143
  %v416 = vmul.f32 %v320, %v144
  %v417 = vmul.f32 %v321, %v145
  %v418 = vmul.f32 %v322, %v146
  %v419 = vmul.f32 %v323, %v147
  %v420 = vmul.f32 %v324, %v148
  %v421 = vmul.f32 %v325, %v149
  %v422 = vmul.f32 %v326, %v150
  %v423 = vmul.f32 %v327, %v151
  %v424 = vmul.f32 %v328, %v152
  %v425 = vmul.f32 %v329, %v153
  %v426 = vmul.f32 %v330, %v154
  %v427 = vmul.f32 %v331, %v155
  %v428 = vmul.f32 %v332, %v156
  %v429 = vmul.f32 %v397, %v173
  %v430 = vmul.f32 %v398, %v174
  %v431 = vmul.f32 %v399, %v175
  %v432 = vmul.f32 %v400, %v176
  %v433 = vmul.f32 %v401, %v177
  %v434 = vmul.f32 %v402, %v178
  %v435 = vmul.f32 %v403, %v179
  %v436 = vmul.f32 %v404, %v180
  %v437 = vmul.f32 %v405, %v181
  %v438 = vmul.f32 %v406, %v182
  %v439 = vmul.f32 %v407, %v183
  %v440 = vmul.f32 %v408, %v184
  %v441 = vmul.f32 %v409, %v185
  %v442 = vmul.f32 %v410, %v186
  %v443 = vmul.f32 %v411, %v187
  %v444 = vmul.f32 %v412, %v188
  %461 = vrot.lane.b32.xlu0 %v42, 32
  %v462 = vpop.permute.xlu0 %461
  %463 = vrot.lane.b32.xlu0 %v43, 32
  %v464 = vpop.permute.xlu0 %463
  %465 = vrot.lane.b32.xlu0 %v44, 32
  %v466 = vpop.permute.xlu0 %465
  %467 = vrot.lane.b32.xlu0 %v45, 32
  %v468 = vpop.permute.xlu0 %467
  %469 = vrot.lane.b32.xlu0 %v46, 32
  %v470 = vpop.permute.xlu0 %469
  %471 = vrot.lane.b32.xlu0 %v47, 32
  %v472 = vpop.permute.xlu0 %471
  %473 = vrot.lane.b32.xlu0 %v48, 32
  %v474 = vpop.permute.xlu0 %473
  %475 = vrot.lane.b32.xlu0 %v49, 32
  %v476 = vpop.permute.xlu0 %475
  %477 = vrot.lane.b32.xlu0 %v50, 32
  %v478 = vpop.permute.xlu0 %477
  %479 = vrot.lane.b32.xlu0 %v51, 32
  %v480 = vpop.permute.xlu0 %479
  %481 = vrot.lane.b32.xlu0 %v52, 32
  %v482 = vpop.permute.xlu0 %481
  %483 = vrot.lane.b32.xlu0 %v53, 32
  %v484 = vpop.permute.xlu0 %483
  %485 = vrot.lane.b32.xlu0 %v54, 32
  %v486 = vpop.permute.xlu0 %485
  %487 = vrot.lane.b32.xlu0 %v55, 32
  %v488 = vpop.permute.xlu0 %487
  %489 = vrot.lane.b32.xlu0 %v56, 32
  %v490 = vpop.permute.xlu0 %489
  %491 = vrot.lane.b32.xlu0 %v57, 32
  %v492 = vpop.permute.xlu0 %491
  %vm509 = vcmask 261120
  %v510 = vsel %vm509, %v26, %v462
  %v511 = vsel %vm509, %v27, %v464
  %v512 = vsel %vm509, %v28, %v466
  %v513 = vsel %vm509, %v29, %v468
  %v514 = vsel %vm509, %v30, %v470
  %v515 = vsel %vm509, %v31, %v472
  %v516 = vsel %vm509, %v32, %v474
  %v517 = vsel %vm509, %v33, %v476
  %v518 = vsel %vm509, %v34, %v478
  %v519 = vsel %vm509, %v35, %v480
  %v520 = vsel %vm509, %v36, %v482
  %v521 = vsel %vm509, %v37, %v484
  %v522 = vsel %vm509, %v38, %v486
  %v523 = vsel %vm509, %v39, %v488
  %v524 = vsel %vm509, %v40, %v490
  %v525 = vsel %vm509, %v41, %v492
  %526 = vmatprep.subr.mxu0 0.0
  %527 = vmatpush1.msra.mxu0 %v510
  %528 = vmatprep.subr.mxu0 0.0
  %529 = vmatpush1.msra.mxu0 %v511
  %530 = vmatprep.subr.mxu0 0.0
  %531 = vmatpush1.msra.mxu0 %v512
  %532 = vmatprep.subr.mxu0 0.0
  %533 = vmatpush1.msra.mxu0 %v513
  %534 = vmatprep.subr.mxu0 0.0
  %535 = vmatpush1.msra.mxu0 %v514
  %536 = vmatprep.subr.mxu0 0.0
  %537 = vmatpush1.msra.mxu0 %v515
  %538 = vmatprep.subr.mxu0 0.0
  %539 = vmatpush1.msra.mxu0 %v516
  %540 = vmatprep.subr.mxu0 0.0
  %541 = vmatpush1.msra.mxu0 %v517
  %542 = vmatprep.subr.mxu0 0.0
  %543 = vmatpush1.msra.mxu0 %v518
  %544 = vmatprep.subr.mxu0 0.0
  %545 = vmatpush1.msra.mxu0 %v519
  %546 = vmatprep.subr.mxu0 0.0
  %547 = vmatpush1.msra.mxu0 %v520
  %548 = vmatprep.subr.mxu0 0.0
  %549 = vmatpush1.msra.mxu0 %v521
  %550 = vmatprep.subr.mxu0 0.0
  %551 = vmatpush1.msra.mxu0 %v522
  %552 = vmatprep.subr.mxu0 0.0
  %553 = vmatpush1.msra.mxu0 %v523
  %554 = vmatprep.subr.mxu0 0.0
  %555 = vmatpush1.msra.mxu0 %v524
  %556 = vmatprep.subr.mxu0 0.0
  %557 = vmatpush1.msra.mxu0 %v525
  %558 = vmatprep.subr.mxu0 0.0
  %559 = vmatpush1.msra.mxu0 0.0
  %560 = vmatprep.subr.mxu0 0.0
  %561 = vmatpush1.msra.mxu0 0.0
  %562 = vmatprep.subr.mxu0 0.0
  %563 = vmatpush1.msra.mxu0 0.0
  %564 = vmatprep.subr.mxu0 0.0
  %565 = vmatpush1.msra.mxu0 0.0
  %566 = vmatprep.subr.mxu0 0.0
  %567 = vmatpush1.msra.mxu0 0.0
  %568 = vmatprep.subr.mxu0 0.0
  %569 = vmatpush1.msra.mxu0 0.0
  %570 = vmatprep.subr.mxu0 0.0
  %571 = vmatpush1.msra.mxu0 0.0
  %572 = vmatprep.subr.mxu0 0.0
  %573 = vmatpush1.msra.mxu0 0.0
  %574 = vmatprep.subr.mxu0 0.0
  %575 = vmatpush1.msra.mxu0 0.0
  %576 = vmatprep.subr.mxu0 0.0
  %577 = vmatpush1.msra.mxu0 0.0
  %578 = vmatprep.subr.mxu0 0.0
  %579 = vmatpush1.msra.mxu0 0.0
  %580 = vmatprep.subr.mxu0 0.0
  %581 = vmatpush1.msra.mxu0 0.0
  %582 = vmatprep.subr.mxu0 0.0
  %583 = vmatpush1.msra.mxu0 0.0
  %584 = vmatprep.subr.mxu0 0.0
  %585 = vmatpush1.msra.mxu0 0.0
  %586 = vmatprep.subr.mxu0 0.0
  %587 = vmatpush1.msra.mxu0 0.0
  %588 = vmatprep.subr.mxu0 0.0
  %589 = vmatpush1.msra.mxu0 0.0
  %590 = vmatprep.mubr.f32.mxu0 0.0
  %591 = vmatmul.mubr.f32.gmra.mrb[0].mxu0 %v413
  %v592 = vpop.f32.mrb[0].mxu0
  %v593 = vadd.f32 0.0, %v592
  %v594 = vpop.f32.mrb[0].mxu0
  %595 = vmatprep.mubr.f32.mxu0 0.0
  %596 = vmatmul.mubr.f32.gmra.mrb[0].mxu0 %v414
  %v597 = vpop.f32.mrb[0].mxu0
  %v598 = vadd.f32 0.0, %v597
  %v599 = vpop.f32.mrb[0].mxu0
  %600 = vmatprep.mubr.f32.mxu0 0.0
  %601 = vmatmul.mubr.f32.gmra.mrb[0].mxu0 %v415
  %v602 = vpop.f32.mrb[0].mxu0
  %v603 = vadd.f32 0.0, %v602
  %v604 = vpop.f32.mrb[0].mxu0
  %605 = vmatprep.mubr.f32.mxu0 0.0
  %606 = vmatmul.mubr.f32.gmra.mrb[0].mxu0 %v416
  %v607 = vpop.f32.mrb[0].mxu0
  %v608 = vadd.f32 0.0, %v607
  %v609 = vpop.f32.mrb[0].mxu0
  %610 = vmatprep.mubr.f32.mxu0 0.0
  %611 = vmatmul.mubr.f32.gmra.mrb[0].mxu0 %v417
  %v612 = vpop.f32.mrb[0].mxu0
  %v613 = vadd.f32 0.0, %v612
  %v614 = vpop.f32.mrb[0].mxu0
  %615 = vmatprep.mubr.f32.mxu0 0.0
  %616 = vmatmul.mubr.f32.gmra.mrb[0].mxu0 %v418
  %v617 = vpop.f32.mrb[0].mxu0
  %v618 = vadd.f32 0.0, %v617
  %v619 = vpop.f32.mrb[0].mxu0
  %620 = vmatprep.mubr.f32.mxu0 0.0
  %621 = vmatmul.mubr.f32.gmra.mrb[0].mxu0 %v419
  %v622 = vpop.f32.mrb[0].mxu0
  %v623 = vadd.f32 0.0, %v622
  %v624 = vpop.f32.mrb[0].mxu0
  %625 = vmatprep.mubr.f32.mxu0 0.0
  %626 = vmatmul.mubr.f32.gmra.mrb[0].mxu0 %v420
  %v627 = vpop.f32.mrb[0].mxu0
  %v628 = vadd.f32 0.0, %v627
  %v629 = vpop.f32.mrb[0].mxu0
  %630 = vmatprep.mubr.f32.mxu0 0.0
  %631 = vmatmul.mubr.f32.gmra.mrb[0].mxu0 %v421
  %v632 = vpop.f32.mrb[0].mxu0
  %v633 = vadd.f32 0.0, %v632
  %v634 = vpop.f32.mrb[0].mxu0
  %635 = vmatprep.mubr.f32.mxu0 0.0
  %636 = vmatmul.mubr.f32.gmra.mrb[0].mxu0 %v422
  %v637 = vpop.f32.mrb[0].mxu0
  %v638 = vadd.f32 0.0, %v637
  %v639 = vpop.f32.mrb[0].mxu0
  %640 = vmatprep.mubr.f32.mxu0 0.0
  %641 = vmatmul.mubr.f32.gmra.mrb[0].mxu0 %v423
  %v642 = vpop.f32.mrb[0].mxu0
  %v643 = vadd.f32 0.0, %v642
  %v644 = vpop.f32.mrb[0].mxu0
  %645 = vmatprep.mubr.f32.mxu0 0.0
  %646 = vmatmul.mubr.f32.gmra.mrb[0].mxu0 %v424
  %v647 = vpop.f32.mrb[0].mxu0
  %v648 = vadd.f32 0.0, %v647
  %v649 = vpop.f32.mrb[0].mxu0
  %650 = vmatprep.mubr.f32.mxu0 0.0
  %651 = vmatmul.mubr.f32.gmra.mrb[0].mxu0 %v425
  %v652 = vpop.f32.mrb[0].mxu0
  %v653 = vadd.f32 0.0, %v652
  %v654 = vpop.f32.mrb[0].mxu0
  %655 = vmatprep.mubr.f32.mxu0 0.0
  %656 = vmatmul.mubr.f32.gmra.mrb[0].mxu0 %v426
  %v657 = vpop.f32.mrb[0].mxu0
  %v658 = vadd.f32 0.0, %v657
  %v659 = vpop.f32.mrb[0].mxu0
  %660 = vmatprep.mubr.f32.mxu0 0.0
  %661 = vmatmul.mubr.f32.gmra.mrb[0].mxu0 %v427
  %v662 = vpop.f32.mrb[0].mxu0
  %v663 = vadd.f32 0.0, %v662
  %v664 = vpop.f32.mrb[0].mxu0
  %665 = vmatprep.mubr.f32.mxu0 0.0
  %666 = vmatmul.mubr.f32.gmra.mrb[0].mxu0 %v428
  %v667 = vpop.f32.mrb[0].mxu0
  %v668 = vadd.f32 0.0, %v667
  %v669 = vpop.f32.mrb[0].mxu0
  %670 = vmatprep.mubr.f32.mxu0 0.0
  %671 = vmatmul.mubr.f32.gmra.mrb[0].mxu0 %v429
  %v672 = vpop.f32.mrb[0].mxu0
  %v673 = vadd.f32 0.0, %v672
  %v674 = vpop.f32.mrb[0].mxu0
  %675 = vmatprep.mubr.f32.mxu0 0.0
  %676 = vmatmul.mubr.f32.gmra.mrb[0].mxu0 %v430
  %v677 = vpop.f32.mrb[0].mxu0
  %v678 = vadd.f32 0.0, %v677
  %v679 = vpop.f32.mrb[0].mxu0
  %680 = vmatprep.mubr.f32.mxu0 0.0
  %681 = vmatmul.mubr.f32.gmra.mrb[0].mxu0 %v431
  %v682 = vpop.f32.mrb[0].mxu0
  %v683 = vadd.f32 0.0, %v682
  %v684 = vpop.f32.mrb[0].mxu0
  %685 = vmatprep.mubr.f32.mxu0 0.0
  %686 = vmatmul.mubr.f32.gmra.mrb[0].mxu0 %v432
  %v687 = vpop.f32.mrb[0].mxu0
  %v688 = vadd.f32 0.0, %v687
  %v689 = vpop.f32.mrb[0].mxu0
  %690 = vmatprep.mubr.f32.mxu0 0.0
  %691 = vmatmul.mubr.f32.gmra.mrb[0].mxu0 %v433
  %v692 = vpop.f32.mrb[0].mxu0
  %v693 = vadd.f32 0.0, %v692
  %v694 = vpop.f32.mrb[0].mxu0
  %695 = vmatprep.mubr.f32.mxu0 0.0
  %696 = vmatmul.mubr.f32.gmra.mrb[0].mxu0 %v434
  %v697 = vpop.f32.mrb[0].mxu0
  %v698 = vadd.f32 0.0, %v697
  %v699 = vpop.f32.mrb[0].mxu0
  %700 = vmatprep.mubr.f32.mxu0 0.0
  %701 = vmatmul.mubr.f32.gmra.mrb[0].mxu0 %v435
  %v702 = vpop.f32.mrb[0].mxu0
  %v703 = vadd.f32 0.0, %v702
  %v704 = vpop.f32.mrb[0].mxu0
  %705 = vmatprep.mubr.f32.mxu0 0.0
  %706 = vmatmul.mubr.f32.gmra.mrb[0].mxu0 %v436
  %v707 = vpop.f32.mrb[0].mxu0
  %v708 = vadd.f32 0.0, %v707
  %v709 = vpop.f32.mrb[0].mxu0
  %710 = vmatprep.mubr.f32.mxu0 0.0
  %711 = vmatmul.mubr.f32.gmra.mrb[0].mxu0 %v437
  %v712 = vpop.f32.mrb[0].mxu0
  %v713 = vadd.f32 0.0, %v712
  %v714 = vpop.f32.mrb[0].mxu0
  %715 = vmatprep.mubr.f32.mxu0 0.0
  %716 = vmatmul.mubr.f32.gmra.mrb[0].mxu0 %v438
  %v717 = vpop.f32.mrb[0].mxu0
  %v718 = vadd.f32 0.0, %v717
  %v719 = vpop.f32.mrb[0].mxu0
  %720 = vmatprep.mubr.f32.mxu0 0.0
  %721 = vmatmul.mubr.f32.gmra.mrb[0].mxu0 %v439
  %v722 = vpop.f32.mrb[0].mxu0
  %v723 = vadd.f32 0.0, %v722
  %v724 = vpop.f32.mrb[0].mxu0
  %725 = vmatprep.mubr.f32.mxu0 0.0
  %726 = vmatmul.mubr.f32.gmra.mrb[0].mxu0 %v440
  %v727 = vpop.f32.mrb[0].mxu0
  %v728 = vadd.f32 0.0, %v727
  %v729 = vpop.f32.mrb[0].mxu0
  %730 = vmatprep.mubr.f32.mxu0 0.0
  %731 = vmatmul.mubr.f32.gmra.mrb[0].mxu0 %v441
  %v732 = vpop.f32.mrb[0].mxu0
  %v733 = vadd.f32 0.0, %v732
  %v734 = vpop.f32.mrb[0].mxu0
  %735 = vmatprep.mubr.f32.mxu0 0.0
  %736 = vmatmul.mubr.f32.gmra.mrb[0].mxu0 %v442
  %v737 = vpop.f32.mrb[0].mxu0
  %v738 = vadd.f32 0.0, %v737
  %v739 = vpop.f32.mrb[0].mxu0
  %740 = vmatprep.mubr.f32.mxu0 0.0
  %741 = vmatmul.mubr.f32.gmra.mrb[0].mxu0 %v443
  %v742 = vpop.f32.mrb[0].mxu0
  %v743 = vadd.f32 0.0, %v742
  %v744 = vpop.f32.mrb[0].mxu0
  %745 = vmatprep.mubr.f32.mxu0 0.0
  %746 = vmatmul.mubr.f32.gmra.mrb[0].mxu0 %v444
  %v747 = vpop.f32.mrb[0].mxu0
  %v748 = vadd.f32 0.0, %v747
  %v749 = vpop.f32.mrb[0].mxu0
  %750 = vdwg.mxu0
  %767 = vrot.lane.b32.xlu0 %v593, 64
  %v768 = vpop.permute.xlu0 %767
  %769 = vrot.lane.b32.xlu0 %v598, 64
  %v770 = vpop.permute.xlu0 %769
  %771 = vrot.lane.b32.xlu0 %v603, 64
  %v772 = vpop.permute.xlu0 %771
  %773 = vrot.lane.b32.xlu0 %v608, 64
  %v774 = vpop.permute.xlu0 %773
  %775 = vrot.lane.b32.xlu0 %v613, 64
  %v776 = vpop.permute.xlu0 %775
  %777 = vrot.lane.b32.xlu0 %v618, 64
  %v778 = vpop.permute.xlu0 %777
  %779 = vrot.lane.b32.xlu0 %v623, 64
  %v780 = vpop.permute.xlu0 %779
  %781 = vrot.lane.b32.xlu0 %v628, 64
  %v782 = vpop.permute.xlu0 %781
  %783 = vrot.lane.b32.xlu0 %v633, 64
  %v784 = vpop.permute.xlu0 %783
  %785 = vrot.lane.b32.xlu0 %v638, 64
  %v786 = vpop.permute.xlu0 %785
  %787 = vrot.lane.b32.xlu0 %v643, 64
  %v788 = vpop.permute.xlu0 %787
  %789 = vrot.lane.b32.xlu0 %v648, 64
  %v790 = vpop.permute.xlu0 %789
  %791 = vrot.lane.b32.xlu0 %v653, 64
  %v792 = vpop.permute.xlu0 %791
  %793 = vrot.lane.b32.xlu0 %v658, 64
  %v794 = vpop.permute.xlu0 %793
  %795 = vrot.lane.b32.xlu0 %v663, 64
  %v796 = vpop.permute.xlu0 %795
  %797 = vrot.lane.b32.xlu0 %v668, 64
  %v798 = vpop.permute.xlu0 %797
  %vm815 = vcmask 523264
  %v816 = vsel %vm815, %v510, %v768
  %v817 = vsel %vm815, %v511, %v770
  %v818 = vsel %vm815, %v512, %v772
  %v819 = vsel %vm815, %v513, %v774
  %v820 = vsel %vm815, %v514, %v776
  %v821 = vsel %vm815, %v515, %v778
  %v822 = vsel %vm815, %v516, %v780
  %v823 = vsel %vm815, %v517, %v782
  %v824 = vsel %vm815, %v518, %v784
  %v825 = vsel %vm815, %v519, %v786
  %v826 = vsel %vm815, %v520, %v788
  %v827 = vsel %vm815, %v521, %v790
  %v828 = vsel %vm815, %v522, %v792
  %v829 = vsel %vm815, %v523, %v794
  %v830 = vsel %vm815, %v524, %v796
  %v831 = vsel %vm815, %v525, %v798
  %v832 = vld [vmem:[%s4] sm:$0xff]
  %v833 = vld [vmem:[%s4 + $0x8] sm:$0xff]
  %v834 = vld [vmem:[%s4 + $0x10] sm:$0xff]
  %v835 = vld [vmem:[%s4 + $0x18] sm:$0xff]
  %v836 = vld [vmem:[%s4 + $0x20] sm:$0xff]
  %v837 = vld [vmem:[%s4 + $0x28] sm:$0xff]
  %v838 = vld [vmem:[%s4 + $0x30] sm:$0xff]
  %v839 = vld [vmem:[%s4 + $0x38] sm:$0xff]
  %v840 = vld [vmem:[%s4 + $0x40] sm:$0xff]
  %v841 = vld [vmem:[%s4 + $0x48] sm:$0xff]
  %v842 = vld [vmem:[%s4 + $0x50] sm:$0xff]
  %v843 = vld [vmem:[%s4 + $0x58] sm:$0xff]
  %v844 = vld [vmem:[%s4 + $0x60] sm:$0xff]
  %v845 = vld [vmem:[%s4 + $0x68] sm:$0xff]
  %v846 = vld [vmem:[%s4 + $0x70] sm:$0xff]
  %v847 = vld [vmem:[%s4 + $0x78] sm:$0xff]
  %v848 = vld [vmem:[%s4 + $0x80] sm:$0xff]
  %v849 = vld [vmem:[%s4 + $0x88] sm:$0xff]
  %v850 = vld [vmem:[%s4 + $0x90] sm:$0xff]
  %v851 = vld [vmem:[%s4 + $0x98] sm:$0xff]
  %v852 = vld [vmem:[%s4 + $0xa0] sm:$0xff]
  %v853 = vld [vmem:[%s4 + $0xa8] sm:$0xff]
  %v854 = vld [vmem:[%s4 + $0xb0] sm:$0xff]
  %v855 = vld [vmem:[%s4 + $0xb8] sm:$0xff]
  %v856 = vld [vmem:[%s6] sm:$0x1]
  %v858 = vlaneseq
  %v859 = vshrl.u32 %v858, 7
  %v860 = vsub.s32 0, %v859
  %v861 = vrot.slane %v856, %v860
  %v864 = vsel %vm815, %v673, 0
  %v867 = vsel %vm815, %v678, 0
  %v870 = vsel %vm815, %v683, 0
  %v873 = vsel %vm815, %v688, 0
  %v876 = vsel %vm815, %v693, 0
  %v879 = vsel %vm815, %v698, 0
  %v882 = vsel %vm815, %v703, 0
  %v885 = vsel %vm815, %v708, 0
  %v888 = vsel %vm815, %v713, 0
  %v891 = vsel %vm815, %v718, 0
  %v894 = vsel %vm815, %v723, 0
  %v897 = vsel %vm815, %v728, 0
  %v900 = vsel %vm815, %v733, 0
  %v903 = vsel %vm815, %v738, 0
  %v906 = vsel %vm815, %v743, 0
  %v909 = vsel %vm815, %v748, 0
  %911 = vmatprep.subr.mxu0 0.0
  %912 = vmatpush1.msra.mxu0 %v832
  %913 = vmatprep.subr.mxu0 0.0
  %914 = vmatpush1.msra.mxu0 %v833
  %915 = vmatprep.subr.mxu0 0.0
  %916 = vmatpush1.msra.mxu0 %v834
  %917 = vmatprep.subr.mxu0 0.0
  %918 = vmatpush1.msra.mxu0 %v835
  %919 = vmatprep.subr.mxu0 0.0
  %920 = vmatpush1.msra.mxu0 %v836
  %921 = vmatprep.subr.mxu0 0.0
  %922 = vmatpush1.msra.mxu0 %v837
  %923 = vmatprep.subr.mxu0 0.0
  %924 = vmatpush1.msra.mxu0 %v838
  %925 = vmatprep.subr.mxu0 0.0
  %926 = vmatpush1.msra.mxu0 %v839
  %927 = vmatprep.subr.mxu0 0.0
  %928 = vmatpush1.msra.mxu0 %v840
  %929 = vmatprep.subr.mxu0 0.0
  %930 = vmatpush1.msra.mxu0 %v841
  %931 = vmatprep.subr.mxu0 0.0
  %932 = vmatpush1.msra.mxu0 %v842
  %933 = vmatprep.subr.mxu0 0.0
  %934 = vmatpush1.msra.mxu0 %v843
  %935 = vmatprep.subr.mxu0 0.0
  %936 = vmatpush1.msra.mxu0 %v844
  %937 = vmatprep.subr.mxu0 0.0
  %938 = vmatpush1.msra.mxu0 %v845
  %939 = vmatprep.subr.mxu0 0.0
  %940 = vmatpush1.msra.mxu0 %v846
  %941 = vmatprep.subr.mxu0 0.0
  %942 = vmatpush1.msra.mxu0 %v847
  %943 = vmatprep.subr.mxu0 0.0
  %944 = vmatpush1.msra.mxu0 %v848
  %945 = vmatprep.subr.mxu0 0.0
  %946 = vmatpush1.msra.mxu0 %v849
  %947 = vmatprep.subr.mxu0 0.0
  %948 = vmatpush1.msra.mxu0 %v850
  %949 = vmatprep.subr.mxu0 0.0
  %950 = vmatpush1.msra.mxu0 %v851
  %951 = vmatprep.subr.mxu0 0.0
  %952 = vmatpush1.msra.mxu0 %v852
  %953 = vmatprep.subr.mxu0 0.0
  %954 = vmatpush1.msra.mxu0 %v853
  %955 = vmatprep.subr.mxu0 0.0
  %956 = vmatpush1.msra.mxu0 %v854
  %957 = vmatprep.subr.mxu0 0.0
  %958 = vmatpush1.msra.mxu0 %v855
  %959 = vmatprep.subr.mxu0 0.0
  %960 = vmatpush1.msra.mxu0 0.0
  %961 = vmatprep.subr.mxu0 0.0
  %962 = vmatpush1.msra.mxu0 0.0
  %963 = vmatprep.subr.mxu0 0.0
  %964 = vmatpush1.msra.mxu0 0.0
  %965 = vmatprep.subr.mxu0 0.0
  %966 = vmatpush1.msra.mxu0 0.0
  %967 = vmatprep.subr.mxu0 0.0
  %968 = vmatpush1.msra.mxu0 0.0
  %969 = vmatprep.subr.mxu0 0.0
  %970 = vmatpush1.msra.mxu0 0.0
  %971 = vmatprep.subr.mxu0 0.0
  %972 = vmatpush1.msra.mxu0 0.0
  %973 = vmatprep.subr.mxu0 0.0
  %974 = vmatpush1.msra.mxu0 0.0
  %975 = vmatprep.mubr.f32.mxu0 %v864
  %976 = vmatmul.mubr.f32.gmra.mrb[0].mxu0 %v816
  %v977 = vpop.f32.mrb[0].mxu0
  %v978 = vadd.f32 %v861, %v977
  %v979 = vpop.f32.mrb[0].mxu0
  %980 = vmatprep.mubr.f32.mxu0 %v867
  %981 = vmatmul.mubr.f32.gmra.mrb[0].mxu0 %v817
  %v982 = vpop.f32.mrb[0].mxu0
  %v983 = vadd.f32 %v861, %v982
  %v984 = vpop.f32.mrb[0].mxu0
  %985 = vmatprep.mubr.f32.mxu0 %v870
  %986 = vmatmul.mubr.f32.gmra.mrb[0].mxu0 %v818
  %v987 = vpop.f32.mrb[0].mxu0
  %v988 = vadd.f32 %v861, %v987
  %v989 = vpop.f32.mrb[0].mxu0
  %990 = vmatprep.mubr.f32.mxu0 %v873
  %991 = vmatmul.mubr.f32.gmra.mrb[0].mxu0 %v819
  %v992 = vpop.f32.mrb[0].mxu0
  %v993 = vadd.f32 %v861, %v992
  %v994 = vpop.f32.mrb[0].mxu0
  %995 = vmatprep.mubr.f32.mxu0 %v876
  %996 = vmatmul.mubr.f32.gmra.mrb[0].mxu0 %v820
  %v997 = vpop.f32.mrb[0].mxu0
  %v998 = vadd.f32 %v861, %v997
  %v999 = vpop.f32.mrb[0].mxu0
  %1000 = vmatprep.mubr.f32.mxu0 %v879
  %1001 = vmatmul.mubr.f32.gmra.mrb[0].mxu0 %v821
  %v1002 = vpop.f32.mrb[0].mxu0
  %v1003 = vadd.f32 %v861, %v1002
  %v1004 = vpop.f32.mrb[0].mxu0
  %1005 = vmatprep.mubr.f32.mxu0 %v882
  %1006 = vmatmul.mubr.f32.gmra.mrb[0].mxu0 %v822
  %v1007 = vpop.f32.mrb[0].mxu0
  %v1008 = vadd.f32 %v861, %v1007
  %v1009 = vpop.f32.mrb[0].mxu0
  %1010 = vmatprep.mubr.f32.mxu0 %v885
  %1011 = vmatmul.mubr.f32.gmra.mrb[0].mxu0 %v823
  %v1012 = vpop.f32.mrb[0].mxu0
  %v1013 = vadd.f32 %v861, %v1012
  %v1014 = vpop.f32.mrb[0].mxu0
  %1015 = vmatprep.mubr.f32.mxu0 %v888
  %1016 = vmatmul.mubr.f32.gmra.mrb[0].mxu0 %v824
  %v1017 = vpop.f32.mrb[0].mxu0
  %v1018 = vadd.f32 %v861, %v1017
  %v1019 = vpop.f32.mrb[0].mxu0
  %1020 = vmatprep.mubr.f32.mxu0 %v891
  %1021 = vmatmul.mubr.f32.gmra.mrb[0].mxu0 %v825
  %v1022 = vpop.f32.mrb[0].mxu0
  %v1023 = vadd.f32 %v861, %v1022
  %v1024 = vpop.f32.mrb[0].mxu0
  %1025 = vmatprep.mubr.f32.mxu0 %v894
  %1026 = vmatmul.mubr.f32.gmra.mrb[0].mxu0 %v826
  %v1027 = vpop.f32.mrb[0].mxu0
  %v1028 = vadd.f32 %v861, %v1027
  %v1029 = vpop.f32.mrb[0].mxu0
  %1030 = vmatprep.mubr.f32.mxu0 %v897
  %1031 = vmatmul.mubr.f32.gmra.mrb[0].mxu0 %v827
  %v1032 = vpop.f32.mrb[0].mxu0
  %v1033 = vadd.f32 %v861, %v1032
  %v1034 = vpop.f32.mrb[0].mxu0
  %1035 = vmatprep.mubr.f32.mxu0 %v900
  %1036 = vmatmul.mubr.f32.gmra.mrb[0].mxu0 %v828
  %v1037 = vpop.f32.mrb[0].mxu0
  %v1038 = vadd.f32 %v861, %v1037
  %v1039 = vpop.f32.mrb[0].mxu0
  %1040 = vmatprep.mubr.f32.mxu0 %v903
  %1041 = vmatmul.mubr.f32.gmra.mrb[0].mxu0 %v829
  %v1042 = vpop.f32.mrb[0].mxu0
  %v1043 = vadd.f32 %v861, %v1042
  %v1044 = vpop.f32.mrb[0].mxu0
  %1045 = vmatprep.mubr.f32.mxu0 %v906
  %1046 = vmatmul.mubr.f32.gmra.mrb[0].mxu0 %v830
  %v1047 = vpop.f32.mrb[0].mxu0
  %v1048 = vadd.f32 %v861, %v1047
  %v1049 = vpop.f32.mrb[0].mxu0
  %1050 = vmatprep.mubr.f32.mxu0 %v909
  %1051 = vmatmul.mubr.f32.gmra.mrb[0].mxu0 %v831
  %v1052 = vpop.f32.mrb[0].mxu0
  %v1053 = vadd.f32 %v861, %v1052
  %v1054 = vpop.f32.mrb[0].mxu0
  %1055 = vdwg.mxu0
  %v1056 = vxor.u32 %v978, 2147483648
  %v1057 = vxor.u32 %v983, 2147483648
  %v1058 = vxor.u32 %v988, 2147483648
  %v1059 = vxor.u32 %v993, 2147483648
  %v1060 = vxor.u32 %v998, 2147483648
  %v1061 = vxor.u32 %v1003, 2147483648
  %v1062 = vxor.u32 %v1008, 2147483648
  %v1063 = vxor.u32 %v1013, 2147483648
  %v1064 = vxor.u32 %v1018, 2147483648
  %v1065 = vxor.u32 %v1023, 2147483648
  %v1066 = vxor.u32 %v1028, 2147483648
  %v1067 = vxor.u32 %v1033, 2147483648
  %v1068 = vxor.u32 %v1038, 2147483648
  %v1069 = vxor.u32 %v1043, 2147483648
  %v1070 = vxor.u32 %v1048, 2147483648
  %v1071 = vxor.u32 %v1053, 2147483648
  %v1072 = vmul.f32 %v1056, 1.442695
  %v1073 = vpow.pop %v1072
  %v1074 = vmul.f32 %v1057, 1.442695
  %v1075 = vpow.pop %v1074
  %v1076 = vmul.f32 %v1058, 1.442695
  %v1077 = vpow.pop %v1076
  %v1078 = vmul.f32 %v1059, 1.442695
  %v1079 = vpow.pop %v1078
  %v1080 = vmul.f32 %v1060, 1.442695
  %v1081 = vpow.pop %v1080
  %v1082 = vmul.f32 %v1061, 1.442695
  %v1083 = vpow.pop %v1082
  %v1084 = vmul.f32 %v1062, 1.442695
  %v1085 = vpow.pop %v1084
  %v1086 = vmul.f32 %v1063, 1.442695
  %v1087 = vpow.pop %v1086
  %v1088 = vmul.f32 %v1064, 1.442695
  %v1089 = vpow.pop %v1088
  %v1090 = vmul.f32 %v1065, 1.442695
  %v1091 = vpow.pop %v1090
  %v1092 = vmul.f32 %v1066, 1.442695
  %v1093 = vpow.pop %v1092
  %v1094 = vmul.f32 %v1067, 1.442695
  %v1095 = vpow.pop %v1094
  %v1096 = vmul.f32 %v1068, 1.442695
  %v1097 = vpow.pop %v1096
  %v1098 = vmul.f32 %v1069, 1.442695
  %v1099 = vpow.pop %v1098
  %v1100 = vmul.f32 %v1070, 1.442695
  %v1101 = vpow.pop %v1100
  %v1102 = vmul.f32 %v1071, 1.442695
  %v1103 = vpow.pop %v1102
  %v1104 = vadd.f32 %v1073, 1.0
  %v1105 = vadd.f32 %v1075, 1.0
  %v1106 = vadd.f32 %v1077, 1.0
  %v1107 = vadd.f32 %v1079, 1.0
  %v1108 = vadd.f32 %v1081, 1.0
  %v1109 = vadd.f32 %v1083, 1.0
  %v1110 = vadd.f32 %v1085, 1.0
  %v1111 = vadd.f32 %v1087, 1.0
  %v1112 = vadd.f32 %v1089, 1.0
  %v1113 = vadd.f32 %v1091, 1.0
  %v1114 = vadd.f32 %v1093, 1.0
  %v1115 = vadd.f32 %v1095, 1.0
  %v1116 = vadd.f32 %v1097, 1.0
  %v1117 = vadd.f32 %v1099, 1.0
  %v1118 = vadd.f32 %v1101, 1.0
  %v1119 = vadd.f32 %v1103, 1.0
  %v1120 = vrcp.pop %v1104
  %v1121 = vmul.f32 1.0, %v1120
  %v1122 = vrcp.pop %v1105
  %v1123 = vmul.f32 1.0, %v1122
  %v1124 = vrcp.pop %v1106
  %v1125 = vmul.f32 1.0, %v1124
  %v1126 = vrcp.pop %v1107
  %v1127 = vmul.f32 1.0, %v1126
  %v1128 = vrcp.pop %v1108
  %v1129 = vmul.f32 1.0, %v1128
  %v1130 = vrcp.pop %v1109
  %v1131 = vmul.f32 1.0, %v1130
  %v1132 = vrcp.pop %v1110
  %v1133 = vmul.f32 1.0, %v1132
  %v1134 = vrcp.pop %v1111
  %v1135 = vmul.f32 1.0, %v1134
  %v1136 = vrcp.pop %v1112
  %v1137 = vmul.f32 1.0, %v1136
  %v1138 = vrcp.pop %v1113
  %v1139 = vmul.f32 1.0, %v1138
  %v1140 = vrcp.pop %v1114
  %v1141 = vmul.f32 1.0, %v1140
  %v1142 = vrcp.pop %v1115
  %v1143 = vmul.f32 1.0, %v1142
  %v1144 = vrcp.pop %v1116
  %v1145 = vmul.f32 1.0, %v1144
  %v1146 = vrcp.pop %v1117
  %v1147 = vmul.f32 1.0, %v1146
  %v1148 = vrcp.pop %v1118
  %v1149 = vmul.f32 1.0, %v1148
  %v1150 = vrcp.pop %v1119
  %v1151 = vmul.f32 1.0, %v1150
  %v1152 = vmul.f32 %v1121, %v42
  %v1153 = vmul.f32 %v1123, %v43
  %v1154 = vmul.f32 %v1125, %v44
  %v1155 = vmul.f32 %v1127, %v45
  %v1156 = vmul.f32 %v1129, %v46
  %v1157 = vmul.f32 %v1131, %v47
  %v1158 = vmul.f32 %v1133, %v48
  %v1159 = vmul.f32 %v1135, %v49
  %v1160 = vmul.f32 %v1137, %v50
  %v1161 = vmul.f32 %v1139, %v51
  %v1162 = vmul.f32 %v1141, %v52
  %v1163 = vmul.f32 %v1143, %v53
  %v1164 = vmul.f32 %v1145, %v54
  %v1165 = vmul.f32 %v1147, %v55
  %v1166 = vmul.f32 %v1149, %v56
  %v1167 = vmul.f32 %v1151, %v57
  %1168 = vmatprep.subr.mxu0 0.0
  %1169 = vmatpush1.msra.mxu0 %v1152
  %1170 = vmatprep.subr.mxu0 0.0
  %1171 = vmatpush1.msra.mxu0 %v1153
  %1172 = vmatprep.subr.mxu0 0.0
  %1173 = vmatpush1.msra.mxu0 %v1154
  %1174 = vmatprep.subr.mxu0 0.0
  %1175 = vmatpush1.msra.mxu0 %v1155
  %1176 = vmatprep.subr.mxu0 0.0
  %1177 = vmatpush1.msra.mxu0 %v1156
  %1178 = vmatprep.subr.mxu0 0.0
  %1179 = vmatpush1.msra.mxu0 %v1157
  %1180 = vmatprep.subr.mxu0 0.0
  %1181 = vmatpush1.msra.mxu0 %v1158
  %1182 = vmatprep.subr.mxu0 0.0
  %1183 = vmatpush1.msra.mxu0 %v1159
  %1184 = vmatprep.subr.mxu0 0.0
  %1185 = vmatpush1.msra.mxu0 %v1160
  %1186 = vmatprep.subr.mxu0 0.0
  %1187 = vmatpush1.msra.mxu0 %v1161
  %1188 = vmatprep.subr.mxu0 0.0
  %1189 = vmatpush1.msra.mxu0 %v1162
  %1190 = vmatprep.subr.mxu0 0.0
  %1191 = vmatpush1.msra.mxu0 %v1163
  %1192 = vmatprep.subr.mxu0 0.0
  %1193 = vmatpush1.msra.mxu0 %v1164
  %1194 = vmatprep.subr.mxu0 0.0
  %1195 = vmatpush1.msra.mxu0 %v1165
  %1196 = vmatprep.subr.mxu0 0.0
  %1197 = vmatpush1.msra.mxu0 %v1166
  %1198 = vmatprep.subr.mxu0 0.0
  %1199 = vmatpush1.msra.mxu0 %v1167
  %1200 = vmatprep.subr.mxu0 0.0
  %1201 = vmatpush1.msra.mxu0 0.0
  %1202 = vmatprep.subr.mxu0 0.0
  %1203 = vmatpush1.msra.mxu0 0.0
  %1204 = vmatprep.subr.mxu0 0.0
  %1205 = vmatpush1.msra.mxu0 0.0
  %1206 = vmatprep.subr.mxu0 0.0
  %1207 = vmatpush1.msra.mxu0 0.0
  %1208 = vmatprep.subr.mxu0 0.0
  %1209 = vmatpush1.msra.mxu0 0.0
  %1210 = vmatprep.subr.mxu0 0.0
  %1211 = vmatpush1.msra.mxu0 0.0
  %1212 = vmatprep.subr.mxu0 0.0
  %1213 = vmatpush1.msra.mxu0 0.0
  %1214 = vmatprep.subr.mxu0 0.0
  %1215 = vmatpush1.msra.mxu0 0.0
  %1216 = vmatprep.subr.mxu0 0.0
  %1217 = vmatpush1.msra.mxu0 0.0
  %1218 = vmatprep.subr.mxu0 0.0
  %1219 = vmatpush1.msra.mxu0 0.0
  %1220 = vmatprep.subr.mxu0 0.0
  %1221 = vmatpush1.msra.mxu0 0.0
  %1222 = vmatprep.subr.mxu0 0.0
  %1223 = vmatpush1.msra.mxu0 0.0
  %1224 = vmatprep.subr.mxu0 0.0
  %1225 = vmatpush1.msra.mxu0 0.0
  %1226 = vmatprep.subr.mxu0 0.0
  %1227 = vmatpush1.msra.mxu0 0.0
  %1228 = vmatprep.subr.mxu0 0.0
  %1229 = vmatpush1.msra.mxu0 0.0
  %1230 = vmatprep.subr.mxu0 0.0
  %1231 = vmatpush1.msra.mxu0 0.0
  %1232 = vmatprep.mubr.f32.mxu0 0.0
  %1233 = vmatmul.mubr.f32.gmra.mrb[0].mxu0 %v413
  %v1234 = vpop.f32.mrb[0].mxu0
  %v1235 = vadd.f32 0.0, %v1234
  %v1236 = vpop.f32.mrb[0].mxu0
  %1237 = vmatprep.mubr.f32.mxu0 0.0
  %1238 = vmatmul.mubr.f32.gmra.mrb[0].mxu0 %v414
  %v1239 = vpop.f32.mrb[0].mxu0
  %v1240 = vadd.f32 0.0, %v1239
  %v1241 = vpop.f32.mrb[0].mxu0
  %1242 = vmatprep.mubr.f32.mxu0 0.0
  %1243 = vmatmul.mubr.f32.gmra.mrb[0].mxu0 %v415
  %v1244 = vpop.f32.mrb[0].mxu0
  %v1245 = vadd.f32 0.0, %v1244
  %v1246 = vpop.f32.mrb[0].mxu0
  %1247 = vmatprep.mubr.f32.mxu0 0.0
  %1248 = vmatmul.mubr.f32.gmra.mrb[0].mxu0 %v416
  %v1249 = vpop.f32.mrb[0].mxu0
  %v1250 = vadd.f32 0.0, %v1249
  %v1251 = vpop.f32.mrb[0].mxu0
  %1252 = vmatprep.mubr.f32.mxu0 0.0
  %1253 = vmatmul.mubr.f32.gmra.mrb[0].mxu0 %v417
  %v1254 = vpop.f32.mrb[0].mxu0
  %v1255 = vadd.f32 0.0, %v1254
  %v1256 = vpop.f32.mrb[0].mxu0
  %1257 = vmatprep.mubr.f32.mxu0 0.0
  %1258 = vmatmul.mubr.f32.gmra.mrb[0].mxu0 %v418
  %v1259 = vpop.f32.mrb[0].mxu0
  %v1260 = vadd.f32 0.0, %v1259
  %v1261 = vpop.f32.mrb[0].mxu0
  %1262 = vmatprep.mubr.f32.mxu0 0.0
  %1263 = vmatmul.mubr.f32.gmra.mrb[0].mxu0 %v419
  %v1264 = vpop.f32.mrb[0].mxu0
  %v1265 = vadd.f32 0.0, %v1264
  %v1266 = vpop.f32.mrb[0].mxu0
  %1267 = vmatprep.mubr.f32.mxu0 0.0
  %1268 = vmatmul.mubr.f32.gmra.mrb[0].mxu0 %v420
  %v1269 = vpop.f32.mrb[0].mxu0
  %v1270 = vadd.f32 0.0, %v1269
  %v1271 = vpop.f32.mrb[0].mxu0
  %1272 = vmatprep.mubr.f32.mxu0 0.0
  %1273 = vmatmul.mubr.f32.gmra.mrb[0].mxu0 %v421
  %v1274 = vpop.f32.mrb[0].mxu0
  %v1275 = vadd.f32 0.0, %v1274
  %v1276 = vpop.f32.mrb[0].mxu0
  %1277 = vmatprep.mubr.f32.mxu0 0.0
  %1278 = vmatmul.mubr.f32.gmra.mrb[0].mxu0 %v422
  %v1279 = vpop.f32.mrb[0].mxu0
  %v1280 = vadd.f32 0.0, %v1279
  %v1281 = vpop.f32.mrb[0].mxu0
  %1282 = vmatprep.mubr.f32.mxu0 0.0
  %1283 = vmatmul.mubr.f32.gmra.mrb[0].mxu0 %v423
  %v1284 = vpop.f32.mrb[0].mxu0
  %v1285 = vadd.f32 0.0, %v1284
  %v1286 = vpop.f32.mrb[0].mxu0
  %1287 = vmatprep.mubr.f32.mxu0 0.0
  %1288 = vmatmul.mubr.f32.gmra.mrb[0].mxu0 %v424
  %v1289 = vpop.f32.mrb[0].mxu0
  %v1290 = vadd.f32 0.0, %v1289
  %v1291 = vpop.f32.mrb[0].mxu0
  %1292 = vmatprep.mubr.f32.mxu0 0.0
  %1293 = vmatmul.mubr.f32.gmra.mrb[0].mxu0 %v425
  %v1294 = vpop.f32.mrb[0].mxu0
  %v1295 = vadd.f32 0.0, %v1294
  %v1296 = vpop.f32.mrb[0].mxu0
  %1297 = vmatprep.mubr.f32.mxu0 0.0
  %1298 = vmatmul.mubr.f32.gmra.mrb[0].mxu0 %v426
  %v1299 = vpop.f32.mrb[0].mxu0
  %v1300 = vadd.f32 0.0, %v1299
  %v1301 = vpop.f32.mrb[0].mxu0
  %1302 = vmatprep.mubr.f32.mxu0 0.0
  %1303 = vmatmul.mubr.f32.gmra.mrb[0].mxu0 %v427
  %v1304 = vpop.f32.mrb[0].mxu0
  %v1305 = vadd.f32 0.0, %v1304
  %v1306 = vpop.f32.mrb[0].mxu0
  %1307 = vmatprep.mubr.f32.mxu0 0.0
  %1308 = vmatmul.mubr.f32.gmra.mrb[0].mxu0 %v428
  %v1309 = vpop.f32.mrb[0].mxu0
  %v1310 = vadd.f32 0.0, %v1309
  %v1311 = vpop.f32.mrb[0].mxu0
  %1312 = vmatprep.mubr.f32.mxu0 0.0
  %1313 = vmatmul.mubr.f32.gmra.mrb[0].mxu0 %v429
  %v1314 = vpop.f32.mrb[0].mxu0
  %v1315 = vadd.f32 0.0, %v1314
  %v1316 = vpop.f32.mrb[0].mxu0
  %1317 = vmatprep.mubr.f32.mxu0 0.0
  %1318 = vmatmul.mubr.f32.gmra.mrb[0].mxu0 %v430
  %v1319 = vpop.f32.mrb[0].mxu0
  %v1320 = vadd.f32 0.0, %v1319
  %v1321 = vpop.f32.mrb[0].mxu0
  %1322 = vmatprep.mubr.f32.mxu0 0.0
  %1323 = vmatmul.mubr.f32.gmra.mrb[0].mxu0 %v431
  %v1324 = vpop.f32.mrb[0].mxu0
  %v1325 = vadd.f32 0.0, %v1324
  %v1326 = vpop.f32.mrb[0].mxu0
  %1327 = vmatprep.mubr.f32.mxu0 0.0
  %1328 = vmatmul.mubr.f32.gmra.mrb[0].mxu0 %v432
  %v1329 = vpop.f32.mrb[0].mxu0
  %v1330 = vadd.f32 0.0, %v1329
  %v1331 = vpop.f32.mrb[0].mxu0
  %1332 = vmatprep.mubr.f32.mxu0 0.0
  %1333 = vmatmul.mubr.f32.gmra.mrb[0].mxu0 %v433
  %v1334 = vpop.f32.mrb[0].mxu0
  %v1335 = vadd.f32 0.0, %v1334
  %v1336 = vpop.f32.mrb[0].mxu0
  %1337 = vmatprep.mubr.f32.mxu0 0.0
  %1338 = vmatmul.mubr.f32.gmra.mrb[0].mxu0 %v434
  %v1339 = vpop.f32.mrb[0].mxu0
  %v1340 = vadd.f32 0.0, %v1339
  %v1341 = vpop.f32.mrb[0].mxu0
  %1342 = vmatprep.mubr.f32.mxu0 0.0
  %1343 = vmatmul.mubr.f32.gmra.mrb[0].mxu0 %v435
  %v1344 = vpop.f32.mrb[0].mxu0
  %v1345 = vadd.f32 0.0, %v1344
  %v1346 = vpop.f32.mrb[0].mxu0
  %1347 = vmatprep.mubr.f32.mxu0 0.0
  %1348 = vmatmul.mubr.f32.gmra.mrb[0].mxu0 %v436
  %v1349 = vpop.f32.mrb[0].mxu0
  %v1350 = vadd.f32 0.0, %v1349
  %v1351 = vpop.f32.mrb[0].mxu0
  %1352 = vmatprep.mubr.f32.mxu0 0.0
  %1353 = vmatmul.mubr.f32.gmra.mrb[0].mxu0 %v437
  %v1354 = vpop.f32.mrb[0].mxu0
  %v1355 = vadd.f32 0.0, %v1354
  %v1356 = vpop.f32.mrb[0].mxu0
  %1357 = vmatprep.mubr.f32.mxu0 0.0
  %1358 = vmatmul.mubr.f32.gmra.mrb[0].mxu0 %v438
  %v1359 = vpop.f32.mrb[0].mxu0
  %v1360 = vadd.f32 0.0, %v1359
  %v1361 = vpop.f32.mrb[0].mxu0
  %1362 = vmatprep.mubr.f32.mxu0 0.0
  %1363 = vmatmul.mubr.f32.gmra.mrb[0].mxu0 %v439
  %v1364 = vpop.f32.mrb[0].mxu0
  %v1365 = vadd.f32 0.0, %v1364
  %v1366 = vpop.f32.mrb[0].mxu0
  %1367 = vmatprep.mubr.f32.mxu0 0.0
  %1368 = vmatmul.mubr.f32.gmra.mrb[0].mxu0 %v440
  %v1369 = vpop.f32.mrb[0].mxu0
  %v1370 = vadd.f32 0.0, %v1369
  %v1371 = vpop.f32.mrb[0].mxu0
  %1372 = vmatprep.mubr.f32.mxu0 0.0
  %1373 = vmatmul.mubr.f32.gmra.mrb[0].mxu0 %v441
  %v1374 = vpop.f32.mrb[0].mxu0
  %v1375 = vadd.f32 0.0, %v1374
  %v1376 = vpop.f32.mrb[0].mxu0
  %1377 = vmatprep.mubr.f32.mxu0 0.0
  %1378 = vmatmul.mubr.f32.gmra.mrb[0].mxu0 %v442
  %v1379 = vpop.f32.mrb[0].mxu0
  %v1380 = vadd.f32 0.0, %v1379
  %v1381 = vpop.f32.mrb[0].mxu0
  %1382 = vmatprep.mubr.f32.mxu0 0.0
  %1383 = vmatmul.mubr.f32.gmra.mrb[0].mxu0 %v443
  %v1384 = vpop.f32.mrb[0].mxu0
  %v1385 = vadd.f32 0.0, %v1384
  %v1386 = vpop.f32.mrb[0].mxu0
  %1387 = vmatprep.mubr.f32.mxu0 0.0
  %1388 = vmatmul.mubr.f32.gmra.mrb[0].mxu0 %v444
  %v1389 = vpop.f32.mrb[0].mxu0
  %v1390 = vadd.f32 0.0, %v1389
  %v1391 = vpop.f32.mrb[0].mxu0
  %1392 = vdwg.mxu0
  %1409 = vrot.lane.b32.xlu0 %v1235, 32
  %v1410 = vpop.permute.xlu0 %1409
  %1411 = vrot.lane.b32.xlu0 %v1240, 32
  %v1412 = vpop.permute.xlu0 %1411
  %1413 = vrot.lane.b32.xlu0 %v1245, 32
  %v1414 = vpop.permute.xlu0 %1413
  %1415 = vrot.lane.b32.xlu0 %v1250, 32
  %v1416 = vpop.permute.xlu0 %1415
  %1417 = vrot.lane.b32.xlu0 %v1255, 32
  %v1418 = vpop.permute.xlu0 %1417
  %1419 = vrot.lane.b32.xlu0 %v1260, 32
  %v1420 = vpop.permute.xlu0 %1419
  %1421 = vrot.lane.b32.xlu0 %v1265, 32
  %v1422 = vpop.permute.xlu0 %1421
  %1423 = vrot.lane.b32.xlu0 %v1270, 32
  %v1424 = vpop.permute.xlu0 %1423
  %1425 = vrot.lane.b32.xlu0 %v1275, 32
  %v1426 = vpop.permute.xlu0 %1425
  %1427 = vrot.lane.b32.xlu0 %v1280, 32
  %v1428 = vpop.permute.xlu0 %1427
  %1429 = vrot.lane.b32.xlu0 %v1285, 32
  %v1430 = vpop.permute.xlu0 %1429
  %1431 = vrot.lane.b32.xlu0 %v1290, 32
  %v1432 = vpop.permute.xlu0 %1431
  %1433 = vrot.lane.b32.xlu0 %v1295, 32
  %v1434 = vpop.permute.xlu0 %1433
  %1435 = vrot.lane.b32.xlu0 %v1300, 32
  %v1436 = vpop.permute.xlu0 %1435
  %1437 = vrot.lane.b32.xlu0 %v1305, 32
  %v1438 = vpop.permute.xlu0 %1437
  %1439 = vrot.lane.b32.xlu0 %v1310, 32
  %v1440 = vpop.permute.xlu0 %1439
  %1473 = vrot.lane.b32.xlu0 %v1315, 64
  %v1474 = vpop.permute.xlu0 %1473
  %1475 = vrot.lane.b32.xlu0 %v1320, 64
  %v1476 = vpop.permute.xlu0 %1475
  %1477 = vrot.lane.b32.xlu0 %v1325, 64
  %v1478 = vpop.permute.xlu0 %1477
  %1479 = vrot.lane.b32.xlu0 %v1330, 64
  %v1480 = vpop.permute.xlu0 %1479
  %1481 = vrot.lane.b32.xlu0 %v1335, 64
  %v1482 = vpop.permute.xlu0 %1481
  %1483 = vrot.lane.b32.xlu0 %v1340, 64
  %v1484 = vpop.permute.xlu0 %1483
  %1485 = vrot.lane.b32.xlu0 %v1345, 64
  %v1486 = vpop.permute.xlu0 %1485
  %1487 = vrot.lane.b32.xlu0 %v1350, 64
  %v1488 = vpop.permute.xlu0 %1487
  %1489 = vrot.lane.b32.xlu0 %v1355, 64
  %v1490 = vpop.permute.xlu0 %1489
  %1491 = vrot.lane.b32.xlu0 %v1360, 64
  %v1492 = vpop.permute.xlu0 %1491
  %1493 = vrot.lane.b32.xlu0 %v1365, 64
  %v1494 = vpop.permute.xlu0 %1493
  %1495 = vrot.lane.b32.xlu0 %v1370, 64
  %v1496 = vpop.permute.xlu0 %1495
  %1497 = vrot.lane.b32.xlu0 %v1375, 64
  %v1498 = vpop.permute.xlu0 %1497
  %1499 = vrot.lane.b32.xlu0 %v1380, 64
  %v1500 = vpop.permute.xlu0 %1499
  %1501 = vrot.lane.b32.xlu0 %v1385, 64
  %v1502 = vpop.permute.xlu0 %1501
  %1503 = vrot.lane.b32.xlu0 %v1390, 64
  %v1504 = vpop.permute.xlu0 %1503
  %v1521 = vsel %vm509, %v1152, %v1410
  %v1522 = vsel %vm509, %v1153, %v1412
  %v1523 = vsel %vm509, %v1154, %v1414
  %v1524 = vsel %vm509, %v1155, %v1416
  %v1525 = vsel %vm509, %v1156, %v1418
  %v1526 = vsel %vm509, %v1157, %v1420
  %v1527 = vsel %vm509, %v1158, %v1422
  %v1528 = vsel %vm509, %v1159, %v1424
  %v1529 = vsel %vm509, %v1160, %v1426
  %v1530 = vsel %vm509, %v1161, %v1428
  %v1531 = vsel %vm509, %v1162, %v1430
  %v1532 = vsel %vm509, %v1163, %v1432
  %v1533 = vsel %vm509, %v1164, %v1434
  %v1534 = vsel %vm509, %v1165, %v1436
  %v1535 = vsel %vm509, %v1166, %v1438
  %v1536 = vsel %vm509, %v1167, %v1440
  %v1537 = vsel %vm815, %v1521, %v1474
  %v1538 = vsel %vm815, %v1522, %v1476
  %v1539 = vsel %vm815, %v1523, %v1478
  %v1540 = vsel %vm815, %v1524, %v1480
  %v1541 = vsel %vm815, %v1525, %v1482
  %v1542 = vsel %vm815, %v1526, %v1484
  %v1543 = vsel %vm815, %v1527, %v1486
  %v1544 = vsel %vm815, %v1528, %v1488
  %v1545 = vsel %vm815, %v1529, %v1490
  %v1546 = vsel %vm815, %v1530, %v1492
  %v1547 = vsel %vm815, %v1531, %v1494
  %v1548 = vsel %vm815, %v1532, %v1496
  %v1549 = vsel %vm815, %v1533, %v1498
  %v1550 = vsel %vm815, %v1534, %v1500
  %v1551 = vsel %vm815, %v1535, %v1502
  %v1552 = vsel %vm815, %v1536, %v1504
  %v1553 = vld [vmem:[%s5] sm:$0xff]
  %v1554 = vld [vmem:[%s5 + $0x8] sm:$0xff]
  %v1555 = vld [vmem:[%s5 + $0x10] sm:$0xff]
  %v1556 = vld [vmem:[%s5 + $0x18] sm:$0xff]
  %v1557 = vld [vmem:[%s5 + $0x20] sm:$0xff]
  %v1558 = vld [vmem:[%s5 + $0x28] sm:$0xff]
  %v1559 = vld [vmem:[%s5 + $0x30] sm:$0xff]
  %v1560 = vld [vmem:[%s5 + $0x38] sm:$0xff]
  %v1561 = vld [vmem:[%s5 + $0x40] sm:$0xff]
  %v1562 = vld [vmem:[%s5 + $0x48] sm:$0xff]
  %v1563 = vld [vmem:[%s5 + $0x50] sm:$0xff]
  %v1564 = vld [vmem:[%s5 + $0x58] sm:$0xff]
  %vm1565 = vcmask 785408
  %v1567 = vsel %vm1565, %v1537, 0
  %v1570 = vsel %vm1565, %v1538, 0
  %v1573 = vsel %vm1565, %v1539, 0
  %v1576 = vsel %vm1565, %v1540, 0
  %v1579 = vsel %vm1565, %v1541, 0
  %v1582 = vsel %vm1565, %v1542, 0
  %v1585 = vsel %vm1565, %v1543, 0
  %v1588 = vsel %vm1565, %v1544, 0
  %v1591 = vsel %vm1565, %v1545, 0
  %v1594 = vsel %vm1565, %v1546, 0
  %v1597 = vsel %vm1565, %v1547, 0
  %v1600 = vsel %vm1565, %v1548, 0
  %v1603 = vsel %vm1565, %v1549, 0
  %v1606 = vsel %vm1565, %v1550, 0
  %v1609 = vsel %vm1565, %v1551, 0
  %v1612 = vsel %vm1565, %v1552, 0
  %1614 = vmatprep.subr.mxu0 0.0
  %1615 = vmatpush1.msra.mxu0 %v1553
  %1616 = vmatprep.subr.mxu0 0.0
  %1617 = vmatpush1.msra.mxu0 %v1554
  %1618 = vmatprep.subr.mxu0 0.0
  %1619 = vmatpush1.msra.mxu0 %v1555
  %1620 = vmatprep.subr.mxu0 0.0
  %1621 = vmatpush1.msra.mxu0 %v1556
  %1622 = vmatprep.subr.mxu0 0.0
  %1623 = vmatpush1.msra.mxu0 %v1557
  %1624 = vmatprep.subr.mxu0 0.0
  %1625 = vmatpush1.msra.mxu0 %v1558
  %1626 = vmatprep.subr.mxu0 0.0
  %1627 = vmatpush1.msra.mxu0 %v1559
  %1628 = vmatprep.subr.mxu0 0.0
  %1629 = vmatpush1.msra.mxu0 %v1560
  %1630 = vmatprep.subr.mxu0 0.0
  %1631 = vmatpush1.msra.mxu0 %v1561
  %1632 = vmatprep.subr.mxu0 0.0
  %1633 = vmatpush1.msra.mxu0 %v1562
  %1634 = vmatprep.subr.mxu0 0.0
  %1635 = vmatpush1.msra.mxu0 %v1563
  %1636 = vmatprep.subr.mxu0 0.0
  %1637 = vmatpush1.msra.mxu0 %v1564
  %1638 = vmatprep.subr.mxu0 0.0
  %1639 = vmatpush1.msra.mxu0 0.0
  %1640 = vmatprep.subr.mxu0 0.0
  %1641 = vmatpush1.msra.mxu0 0.0
  %1642 = vmatprep.subr.mxu0 0.0
  %1643 = vmatpush1.msra.mxu0 0.0
  %1644 = vmatprep.subr.mxu0 0.0
  %1645 = vmatpush1.msra.mxu0 0.0
  %1646 = vmatprep.subr.mxu0 0.0
  %1647 = vmatpush1.msra.mxu0 0.0
  %1648 = vmatprep.subr.mxu0 0.0
  %1649 = vmatpush1.msra.mxu0 0.0
  %1650 = vmatprep.subr.mxu0 0.0
  %1651 = vmatpush1.msra.mxu0 0.0
  %1652 = vmatprep.subr.mxu0 0.0
  %1653 = vmatpush1.msra.mxu0 0.0
  %1654 = vmatprep.subr.mxu0 0.0
  %1655 = vmatpush1.msra.mxu0 0.0
  %1656 = vmatprep.subr.mxu0 0.0
  %1657 = vmatpush1.msra.mxu0 0.0
  %1658 = vmatprep.subr.mxu0 0.0
  %1659 = vmatpush1.msra.mxu0 0.0
  %1660 = vmatprep.subr.mxu0 0.0
  %1661 = vmatpush1.msra.mxu0 0.0
  %1662 = vmatprep.subr.mxu0 0.0
  %1663 = vmatpush1.msra.mxu0 0.0
  %1664 = vmatprep.subr.mxu0 0.0
  %1665 = vmatpush1.msra.mxu0 0.0
  %1666 = vmatprep.subr.mxu0 0.0
  %1667 = vmatpush1.msra.mxu0 0.0
  %1668 = vmatprep.subr.mxu0 0.0
  %1669 = vmatpush1.msra.mxu0 0.0
  %1670 = vmatprep.subr.mxu0 0.0
  %1671 = vmatpush1.msra.mxu0 0.0
  %1672 = vmatprep.subr.mxu0 0.0
  %1673 = vmatpush1.msra.mxu0 0.0
  %1674 = vmatprep.subr.mxu0 0.0
  %1675 = vmatpush1.msra.mxu0 0.0
  %1676 = vmatprep.subr.mxu0 0.0
  %1677 = vmatpush1.msra.mxu0 0.0
  %1678 = vmatprep.mubr.f32.mxu0 0.0
  %1679 = vmatmul.mubr.f32.gmra.mrb[0].mxu0 %v1567
  %v1680 = vpop.f32.mrb[0].mxu0
  %v1681 = vadd.f32 0.0, %v1680
  %v1682 = vpop.f32.mrb[0].mxu0
  %1683 = vmatprep.mubr.f32.mxu0 0.0
  %1684 = vmatmul.mubr.f32.gmra.mrb[0].mxu0 %v1570
  %v1685 = vpop.f32.mrb[0].mxu0
  %v1686 = vadd.f32 0.0, %v1685
  %v1687 = vpop.f32.mrb[0].mxu0
  %1688 = vmatprep.mubr.f32.mxu0 0.0
  %1689 = vmatmul.mubr.f32.gmra.mrb[0].mxu0 %v1573
  %v1690 = vpop.f32.mrb[0].mxu0
  %v1691 = vadd.f32 0.0, %v1690
  %v1692 = vpop.f32.mrb[0].mxu0
  %1693 = vmatprep.mubr.f32.mxu0 0.0
  %1694 = vmatmul.mubr.f32.gmra.mrb[0].mxu0 %v1576
  %v1695 = vpop.f32.mrb[0].mxu0
  %v1696 = vadd.f32 0.0, %v1695
  %v1697 = vpop.f32.mrb[0].mxu0
  %1698 = vmatprep.mubr.f32.mxu0 0.0
  %1699 = vmatmul.mubr.f32.gmra.mrb[0].mxu0 %v1579
  %v1700 = vpop.f32.mrb[0].mxu0
  %v1701 = vadd.f32 0.0, %v1700
  %v1702 = vpop.f32.mrb[0].mxu0
  %1703 = vmatprep.mubr.f32.mxu0 0.0
  %1704 = vmatmul.mubr.f32.gmra.mrb[0].mxu0 %v1582
  %v1705 = vpop.f32.mrb[0].mxu0
  %v1706 = vadd.f32 0.0, %v1705
  %v1707 = vpop.f32.mrb[0].mxu0
  %1708 = vmatprep.mubr.f32.mxu0 0.0
  %1709 = vmatmul.mubr.f32.gmra.mrb[0].mxu0 %v1585
  %v1710 = vpop.f32.mrb[0].mxu0
  %v1711 = vadd.f32 0.0, %v1710
  %v1712 = vpop.f32.mrb[0].mxu0
  %1713 = vmatprep.mubr.f32.mxu0 0.0
  %1714 = vmatmul.mubr.f32.gmra.mrb[0].mxu0 %v1588
  %v1715 = vpop.f32.mrb[0].mxu0
  %v1716 = vadd.f32 0.0, %v1715
  %v1717 = vpop.f32.mrb[0].mxu0
  %1718 = vmatprep.mubr.f32.mxu0 0.0
  %1719 = vmatmul.mubr.f32.gmra.mrb[0].mxu0 %v1591
  %v1720 = vpop.f32.mrb[0].mxu0
  %v1721 = vadd.f32 0.0, %v1720
  %v1722 = vpop.f32.mrb[0].mxu0
  %1723 = vmatprep.mubr.f32.mxu0 0.0
  %1724 = vmatmul.mubr.f32.gmra.mrb[0].mxu0 %v1594
  %v1725 = vpop.f32.mrb[0].mxu0
  %v1726 = vadd.f32 0.0, %v1725
  %v1727 = vpop.f32.mrb[0].mxu0
  %1728 = vmatprep.mubr.f32.mxu0 0.0
  %1729 = vmatmul.mubr.f32.gmra.mrb[0].mxu0 %v1597
  %v1730 = vpop.f32.mrb[0].mxu0
  %v1731 = vadd.f32 0.0, %v1730
  %v1732 = vpop.f32.mrb[0].mxu0
  %1733 = vmatprep.mubr.f32.mxu0 0.0
  %1734 = vmatmul.mubr.f32.gmra.mrb[0].mxu0 %v1600
  %v1735 = vpop.f32.mrb[0].mxu0
  %v1736 = vadd.f32 0.0, %v1735
  %v1737 = vpop.f32.mrb[0].mxu0
  %1738 = vmatprep.mubr.f32.mxu0 0.0
  %1739 = vmatmul.mubr.f32.gmra.mrb[0].mxu0 %v1603
  %v1740 = vpop.f32.mrb[0].mxu0
  %v1741 = vadd.f32 0.0, %v1740
  %v1742 = vpop.f32.mrb[0].mxu0
  %1743 = vmatprep.mubr.f32.mxu0 0.0
  %1744 = vmatmul.mubr.f32.gmra.mrb[0].mxu0 %v1606
  %v1745 = vpop.f32.mrb[0].mxu0
  %v1746 = vadd.f32 0.0, %v1745
  %v1747 = vpop.f32.mrb[0].mxu0
  %1748 = vmatprep.mubr.f32.mxu0 0.0
  %1749 = vmatmul.mubr.f32.gmra.mrb[0].mxu0 %v1609
  %v1750 = vpop.f32.mrb[0].mxu0
  %v1751 = vadd.f32 0.0, %v1750
  %v1752 = vpop.f32.mrb[0].mxu0
  %1753 = vmatprep.mubr.f32.mxu0 0.0
  %1754 = vmatmul.mubr.f32.gmra.mrb[0].mxu0 %v1612
  %v1755 = vpop.f32.mrb[0].mxu0
  %v1756 = vadd.f32 0.0, %v1755
  %v1757 = vpop.f32.mrb[0].mxu0
  %1758 = vdwg.mxu0
  %1775 = vrot.lane.b32.xlu0 %v1681, 64
  %v1776 = vpop.permute.xlu0 %1775
  %1777 = vrot.lane.b32.xlu0 %v1686, 64
  %v1778 = vpop.permute.xlu0 %1777
  %1779 = vrot.lane.b32.xlu0 %v1691, 64
  %v1780 = vpop.permute.xlu0 %1779
  %1781 = vrot.lane.b32.xlu0 %v1696, 64
  %v1782 = vpop.permute.xlu0 %1781
  %1783 = vrot.lane.b32.xlu0 %v1701, 64
  %v1784 = vpop.permute.xlu0 %1783
  %1785 = vrot.lane.b32.xlu0 %v1706, 64
  %v1786 = vpop.permute.xlu0 %1785
  %1787 = vrot.lane.b32.xlu0 %v1711, 64
  %v1788 = vpop.permute.xlu0 %1787
  %1789 = vrot.lane.b32.xlu0 %v1716, 64
  %v1790 = vpop.permute.xlu0 %1789
  %1791 = vrot.lane.b32.xlu0 %v1721, 64
  %v1792 = vpop.permute.xlu0 %1791
  %1793 = vrot.lane.b32.xlu0 %v1726, 64
  %v1794 = vpop.permute.xlu0 %1793
  %1795 = vrot.lane.b32.xlu0 %v1731, 64
  %v1796 = vpop.permute.xlu0 %1795
  %1797 = vrot.lane.b32.xlu0 %v1736, 64
  %v1798 = vpop.permute.xlu0 %1797
  %1799 = vrot.lane.b32.xlu0 %v1741, 64
  %v1800 = vpop.permute.xlu0 %1799
  %1801 = vrot.lane.b32.xlu0 %v1746, 64
  %v1802 = vpop.permute.xlu0 %1801
  %1803 = vrot.lane.b32.xlu0 %v1751, 64
  %v1804 = vpop.permute.xlu0 %1803
  %1805 = vrot.lane.b32.xlu0 %v1756, 64
  %v1806 = vpop.permute.xlu0 %1805
  %v1823 = vadd.f32 %v978, %v1776
  %v1824 = vadd.f32 %v983, %v1778
  %v1825 = vadd.f32 %v988, %v1780
  %v1826 = vadd.f32 %v993, %v1782
  %v1827 = vadd.f32 %v998, %v1784
  %v1828 = vadd.f32 %v1003, %v1786
  %v1829 = vadd.f32 %v1008, %v1788
  %v1830 = vadd.f32 %v1013, %v1790
  %v1831 = vadd.f32 %v1018, %v1792
  %v1832 = vadd.f32 %v1023, %v1794
  %v1833 = vadd.f32 %v1028, %v1796
  %v1834 = vadd.f32 %v1033, %v1798
  %v1835 = vadd.f32 %v1038, %v1800
  %v1836 = vadd.f32 %v1043, %v1802
  %v1837 = vadd.f32 %v1048, %v1804
  %v1838 = vadd.f32 %v1053, %v1806
  %v1839 = vtanh.pop %v1823
  %v1840 = vtanh.pop %v1824
  %v1841 = vtanh.pop %v1825
  %v1842 = vtanh.pop %v1826
  %v1843 = vtanh.pop %v1827
  %v1844 = vtanh.pop %v1828
  %v1845 = vtanh.pop %v1829
  %v1846 = vtanh.pop %v1830
  %v1847 = vtanh.pop %v1831
  %v1848 = vtanh.pop %v1832
  %v1849 = vtanh.pop %v1833
  %v1850 = vtanh.pop %v1834
  %v1851 = vtanh.pop %v1835
  %v1852 = vtanh.pop %v1836
  %v1853 = vtanh.pop %v1837
  %v1854 = vtanh.pop %v1838
  %v1855 = vmul.f32 %v1121, %v462
  %v1856 = vmul.f32 %v1123, %v464
  %v1857 = vmul.f32 %v1125, %v466
  %v1858 = vmul.f32 %v1127, %v468
  %v1859 = vmul.f32 %v1129, %v470
  %v1860 = vmul.f32 %v1131, %v472
  %v1861 = vmul.f32 %v1133, %v474
  %v1862 = vmul.f32 %v1135, %v476
  %v1863 = vmul.f32 %v1137, %v478
  %v1864 = vmul.f32 %v1139, %v480
  %v1865 = vmul.f32 %v1141, %v482
  %v1866 = vmul.f32 %v1143, %v484
  %v1867 = vmul.f32 %v1145, %v486
  %v1868 = vmul.f32 %v1147, %v488
  %v1869 = vmul.f32 %v1149, %v490
  %v1870 = vmul.f32 %v1151, %v492
  %v1871 = vsub.f32 1.0, %v1121
  %v1872 = vsub.f32 1.0, %v1123
  %v1873 = vsub.f32 1.0, %v1125
  %v1874 = vsub.f32 1.0, %v1127
  %v1875 = vsub.f32 1.0, %v1129
  %v1876 = vsub.f32 1.0, %v1131
  %v1877 = vsub.f32 1.0, %v1133
  %v1878 = vsub.f32 1.0, %v1135
  %v1879 = vsub.f32 1.0, %v1137
  %v1880 = vsub.f32 1.0, %v1139
  %v1881 = vsub.f32 1.0, %v1141
  %v1882 = vsub.f32 1.0, %v1143
  %v1883 = vsub.f32 1.0, %v1145
  %v1884 = vsub.f32 1.0, %v1147
  %v1885 = vsub.f32 1.0, %v1149
  %v1886 = vsub.f32 1.0, %v1151
  %1903 = vrot.lane.b32.xlu0 %v1839, 96
  %v1904 = vpop.permute.xlu0 %1903
  %1905 = vrot.lane.b32.xlu0 %v1840, 96
  %v1906 = vpop.permute.xlu0 %1905
  %1907 = vrot.lane.b32.xlu0 %v1841, 96
  %v1908 = vpop.permute.xlu0 %1907
  %1909 = vrot.lane.b32.xlu0 %v1842, 96
  %v1910 = vpop.permute.xlu0 %1909
  %1911 = vrot.lane.b32.xlu0 %v1843, 96
  %v1912 = vpop.permute.xlu0 %1911
  %1913 = vrot.lane.b32.xlu0 %v1844, 96
  %v1914 = vpop.permute.xlu0 %1913
  %1915 = vrot.lane.b32.xlu0 %v1845, 96
  %v1916 = vpop.permute.xlu0 %1915
  %1917 = vrot.lane.b32.xlu0 %v1846, 96
  %v1918 = vpop.permute.xlu0 %1917
  %1919 = vrot.lane.b32.xlu0 %v1847, 96
  %v1920 = vpop.permute.xlu0 %1919
  %1921 = vrot.lane.b32.xlu0 %v1848, 96
  %v1922 = vpop.permute.xlu0 %1921
  %1923 = vrot.lane.b32.xlu0 %v1849, 96
  %v1924 = vpop.permute.xlu0 %1923
  %1925 = vrot.lane.b32.xlu0 %v1850, 96
  %v1926 = vpop.permute.xlu0 %1925
  %1927 = vrot.lane.b32.xlu0 %v1851, 96
  %v1928 = vpop.permute.xlu0 %1927
  %1929 = vrot.lane.b32.xlu0 %v1852, 96
  %v1930 = vpop.permute.xlu0 %1929
  %1931 = vrot.lane.b32.xlu0 %v1853, 96
  %v1932 = vpop.permute.xlu0 %1931
  %1933 = vrot.lane.b32.xlu0 %v1854, 96
  %v1934 = vpop.permute.xlu0 %1933
  %v1951 = vmul.f32 %v1871, %v1904
  %v1952 = vmul.f32 %v1872, %v1906
  %v1953 = vmul.f32 %v1873, %v1908
  %v1954 = vmul.f32 %v1874, %v1910
  %v1955 = vmul.f32 %v1875, %v1912
  %v1956 = vmul.f32 %v1876, %v1914
  %v1957 = vmul.f32 %v1877, %v1916
  %v1958 = vmul.f32 %v1878, %v1918
  %v1959 = vmul.f32 %v1879, %v1920
  %v1960 = vmul.f32 %v1880, %v1922
  %v1961 = vmul.f32 %v1881, %v1924
  %v1962 = vmul.f32 %v1882, %v1926
  %v1963 = vmul.f32 %v1883, %v1928
  %v1964 = vmul.f32 %v1884, %v1930
  %v1965 = vmul.f32 %v1885, %v1932
  %v1966 = vmul.f32 %v1886, %v1934
  %v1967 = vadd.f32 %v1855, %v1951
  %v1968 = vadd.f32 %v1856, %v1952
  %v1969 = vadd.f32 %v1857, %v1953
  %v1970 = vadd.f32 %v1858, %v1954
  %v1971 = vadd.f32 %v1859, %v1955
  %v1972 = vadd.f32 %v1860, %v1956
  %v1973 = vadd.f32 %v1861, %v1957
  %v1974 = vadd.f32 %v1862, %v1958
  %v1975 = vadd.f32 %v1863, %v1959
  %v1976 = vadd.f32 %v1864, %v1960
  %v1977 = vadd.f32 %v1865, %v1961
  %v1978 = vadd.f32 %v1866, %v1962
  %v1979 = vadd.f32 %v1867, %v1963
  %v1980 = vadd.f32 %v1868, %v1964
  %v1981 = vadd.f32 %v1869, %v1965
  %v1982 = vadd.f32 %v1870, %v1966
  %1999 = vrot.lane.b32.xlu0 %v1967, 96
  %v2000 = vpop.permute.xlu0 %1999
  %2001 = vrot.lane.b32.xlu0 %v1968, 96
  %v2002 = vpop.permute.xlu0 %2001
  %2003 = vrot.lane.b32.xlu0 %v1969, 96
  %v2004 = vpop.permute.xlu0 %2003
  %2005 = vrot.lane.b32.xlu0 %v1970, 96
  %v2006 = vpop.permute.xlu0 %2005
  %2007 = vrot.lane.b32.xlu0 %v1971, 96
  %v2008 = vpop.permute.xlu0 %2007
  %2009 = vrot.lane.b32.xlu0 %v1972, 96
  %v2010 = vpop.permute.xlu0 %2009
  %2011 = vrot.lane.b32.xlu0 %v1973, 96
  %v2012 = vpop.permute.xlu0 %2011
  %2013 = vrot.lane.b32.xlu0 %v1974, 96
  %v2014 = vpop.permute.xlu0 %2013
  %2015 = vrot.lane.b32.xlu0 %v1975, 96
  %v2016 = vpop.permute.xlu0 %2015
  %2017 = vrot.lane.b32.xlu0 %v1976, 96
  %v2018 = vpop.permute.xlu0 %2017
  %2019 = vrot.lane.b32.xlu0 %v1977, 96
  %v2020 = vpop.permute.xlu0 %2019
  %2021 = vrot.lane.b32.xlu0 %v1978, 96
  %v2022 = vpop.permute.xlu0 %2021
  %2023 = vrot.lane.b32.xlu0 %v1979, 96
  %v2024 = vpop.permute.xlu0 %2023
  %2025 = vrot.lane.b32.xlu0 %v1980, 96
  %v2026 = vpop.permute.xlu0 %2025
  %2027 = vrot.lane.b32.xlu0 %v1981, 96
  %v2028 = vpop.permute.xlu0 %2027
  %2029 = vrot.lane.b32.xlu0 %v1982, 96
  %v2030 = vpop.permute.xlu0 %2029
  %2047 = vst.msk [vmem:[%s7] sm:$0xff] %vm509, %v2000
  %2048 = vst.msk [vmem:[%s7 + $0x8] sm:$0xff] %vm509, %v2002
  %2049 = vst.msk [vmem:[%s7 + $0x10] sm:$0xff] %vm509, %v2004
  %2050 = vst.msk [vmem:[%s7 + $0x18] sm:$0xff] %vm509, %v2006
  %2051 = vst.msk [vmem:[%s7 + $0x20] sm:$0xff] %vm509, %v2008
  %2052 = vst.msk [vmem:[%s7 + $0x28] sm:$0xff] %vm509, %v2010
  %2053 = vst.msk [vmem:[%s7 + $0x30] sm:$0xff] %vm509, %v2012
  %2054 = vst.msk [vmem:[%s7 + $0x38] sm:$0xff] %vm509, %v2014
  %2055 = vst.msk [vmem:[%s7 + $0x40] sm:$0xff] %vm509, %v2016
  %2056 = vst.msk [vmem:[%s7 + $0x48] sm:$0xff] %vm509, %v2018
  %2057 = vst.msk [vmem:[%s7 + $0x50] sm:$0xff] %vm509, %v2020
  %2058 = vst.msk [vmem:[%s7 + $0x58] sm:$0xff] %vm509, %v2022
  %2059 = vst.msk [vmem:[%s7 + $0x60] sm:$0xff] %vm509, %v2024
  %2060 = vst.msk [vmem:[%s7 + $0x68] sm:$0xff] %vm509, %v2026
  %2061 = vst.msk [vmem:[%s7 + $0x70] sm:$0xff] %vm509, %v2028
  %2062 = vst.msk [vmem:[%s7 + $0x78] sm:$0xff] %vm509, %v2030
  // Predicated region
  $region30: #{dcgru_cell.1} parent=0 // pred_check
    _
  $region31: #{dcgru_cell.1} parent=0 // pred_check_branch
    %2064 = sbr.rel (0) target = $region33
  $region32: #{dcgru_cell.1} parent=0 // pred_region
    _
  $region33: #{dcgru_cell.1} parent=0 // pred_fallthru
    _
  // Predicated region
  $region34: #{dcgru_cell.1} parent=0 // pred_check
    _
  $region35: #{dcgru_cell.1} parent=0 // pred_check_branch
    %2066 = sbr.rel (0) target = $region37
  $region36: #{dcgru_cell.1} parent=0 // pred_region
    _
  $region37: #{dcgru_cell.1} parent=0 // pred_fallthru
    _

</llo_original>
